<compile_context>
chip_gen: v5e
topology: v5e:2x2
jax: 0.10.0
libtpu: 0.0.40
codegen_flags: <defaults>
</compile_context>

<pallas_src>
import jax
import jax.numpy as jnp
from jax.experimental import pallas as pl
from jax.experimental.pallas import tpu as pltpu


def _round_up(x, m):
    return (x + m - 1) // m * m


def _pick_time_chunk(T, max_chunk=16):
    """Largest divisor of T that is <= max_chunk (keeps blocks exact)."""
    for tc in range(min(T, max_chunk), 0, -1):
        if T % tc == 0:
            return tc
    return 1


def _reverse_lstm_kernel(xw_ref, h0_ref, c0_ref, whh_ref,
                         y_ref, hN_ref, cN_ref, h_sc, c_sc):
    """One grid step = one time chunk, iterated in reverse inside the chunk.

    xw_ref : (Tc, Bp, 4Hp)  precomputed x @ W_ih^T + bias, gate order (i,f,o,g)
    whh_ref: (Hp, 4Hp)      W_hh^T, gate order (i,f,o,g)
    y_ref  : (Tc, Bp, Hp)
    h_sc/c_sc : (Bp, Hp) running state, persists across grid steps.
    """
    chunk = pl.program_id(0)
    Tc = xw_ref.shape[0]
    Hp = h_sc.shape[-1]

    # Load the initial state on the first processed (= last-in-time) chunk.
    @pl.when(chunk == 0)
    def _():
        h_sc[...] = h0_ref[...]
        c_sc[...] = c0_ref[...]

    # Hoist the recurrent weight load out of the inner time loop; carry state
    # in registers for the whole chunk (scratch touched once at entry/exit).
    whh = whh_ref[...]                                     # (Hp, 4Hp)
    h = h_sc[...]                                          # (Bp, Hp)
    c = c_sc[...]                                          # (Bp, Hp)

    # Static, fully-unrolled reverse-time loop: static slices, serial chain.
    for t in range(Tc - 1, -1, -1):
        # Single per-step matmul; input projection + bias already folded in xw.
        gates = xw_ref[t] + jnp.dot(h, whh,
                                    preferred_element_type=jnp.float32)
        sig = jax.nn.sigmoid(gates[:, : 3 * Hp])           # one EUP slab: i,f,o
        i_g = sig[:, 0 * Hp:1 * Hp]
        f_g = sig[:, 1 * Hp:2 * Hp]
        o_g = sig[:, 2 * Hp:3 * Hp]
        g_g = jnp.tanh(gates[:, 3 * Hp:])
        c = f_g * c + i_g * g_g
        h = o_g * jnp.tanh(c)
        y_ref[t] = h.astype(y_ref.dtype)                   # lane-dense (Hp=128k)

    h_sc[...] = h
    c_sc[...] = c

    # Emit the final state after the last processed chunk (original t = 0).
    @pl.when(chunk == pl.num_programs(0) - 1)
    def _():
        hN_ref[...] = h.astype(hN_ref.dtype)
        cN_ref[...] = c.astype(cN_ref.dtype)


def reverse_lstm_layer(x, h0, c0, w_ih, w_hh, b_ih, b_hh, *, max_time_chunk=16):
    """x: (T, B, D); h0, c0: (B, H); w_ih: (4H, D); w_hh: (4H, H); b_*: (4H,)."""
    T, B, D = x.shape
    H = h0.shape[-1]
    f32 = jnp.float32

    Hp = max(_round_up(H, 128), 128)    # lane-aligned hidden size
    Bp = max(_round_up(B, 8), 8)        # sublane-aligned batch (f32)
    Tc = _pick_time_chunk(T, max_time_chunk)
    n_chunks = T // Tc

    # --- Re-pack weights: transpose, reorder gates (i,f,g,o) -> (i,f,o,g),
    # --- pad each gate block to Hp lanes (zero padding keeps padded lanes inert:
    # --- padded c stays 0, padded h stays 0, and zero W_hh rows/cols never
    # --- contaminate real lanes).
    def pack_w(w, k_pad):
        wi, wf, wg, wo = (w[0:H], w[H:2 * H], w[2 * H:3 * H], w[3 * H:4 * H])
        def blk(wb):      # (H, K) -> (k_pad, Hp)
            return jnp.pad(wb.astype(f32).T,
                           ((0, k_pad - wb.shape[1]), (0, Hp - H)))
        return jnp.concatenate([blk(wi), blk(wf), blk(wo), blk(wg)], axis=1)

    w_ih_p = pack_w(w_ih, D)            # (D, 4Hp)
    w_hh_p = pack_w(w_hh, Hp)           # (Hp, 4Hp)

    b = (b_ih + b_hh).astype(f32)
    bi, bf, bg, bo = b[0:H], b[H:2 * H], b[2 * H:3 * H], b[3 * H:4 * H]
    pad_b = lambda v: jnp.pad(v, (0, Hp - H))
    b_p = jnp.concatenate([pad_b(bi), pad_b(bf), pad_b(bo), pad_b(bg)])  # (4Hp,)

    # --- Hoisted input projection: pad the batch first so the big matmul is
    # --- sublane-aligned, then one (T*Bp, D) x (D, 4Hp) matmul with the bias
    # --- folded in; the serial kernel never touches x or W_ih.
    x_p = jnp.pad(x.astype(f32), ((0, 0), (0, Bp - B), (0, 0)))      # (T, Bp, D)
    xw = (x_p.reshape(T * Bp, D) @ w_ih_p + b_p).reshape(T, Bp, 4 * Hp)

    h0_p = jnp.pad(h0.astype(f32), ((0, Bp - B), (0, Hp - H)))
    c0_p = jnp.pad(c0.astype(f32), ((0, Bp - B), (0, Hp - H)))

    rev = lambda c: (n_chunks - 1 - c, 0, 0)    # reverse-time chunk index
    const2 = lambda c: (0, 0)

    grid_spec = pltpu.PrefetchScalarGridSpec(
        num_scalar_prefetch=0,
        grid=(n_chunks,),
        in_specs=[
            pl.BlockSpec((Tc, Bp, 4 * Hp), rev),            # xW chunk (reversed)
            pl.BlockSpec((Bp, Hp), const2),                 # h0
            pl.BlockSpec((Bp, Hp), const2),                 # c0
            pl.BlockSpec((Hp, 4 * Hp), const2),             # W_hh^T
        ],
        out_specs=[
            pl.BlockSpec((Tc, Bp, Hp), rev),                # y chunk (reversed)
            pl.BlockSpec((Bp, Hp), const2),                 # final h
            pl.BlockSpec((Bp, Hp), const2),                 # final c
        ],
        scratch_shapes=[
            pltpu.VMEM((Bp, Hp), f32),                      # running h
            pltpu.VMEM((Bp, Hp), f32),                      # running c
        ],
    )

    y_p, hN_p, cN_p = pl.pallas_call(
        _reverse_lstm_kernel,
        out_shape=(
            jax.ShapeDtypeStruct((T, Bp, Hp), f32),
            jax.ShapeDtypeStruct((Bp, Hp), f32),
            jax.ShapeDtypeStruct((Bp, Hp), f32),
        ),
        grid_spec=grid_spec,
        compiler_params=pltpu.CompilerParams(
            dimension_semantics=("arbitrary",),             # serial recurrence
            vmem_limit_bytes=48 * 1024 * 1024,              # safe on v5e/v6e/v7x
        ),
    )(xw, h0_p, c0_p, w_hh_p)

    y = y_p[:, :B, :H].astype(x.dtype)
    hN = hN_p[:B, :H].astype(x.dtype)
    cN = cN_p[:B, :H].astype(x.dtype)
    return y, (hN, cN)


def reverse_lstm_layer_ref(x, h0, c0, w_ih, w_hh, b_ih, b_hh):
    """Pure-JAX reference mirroring the PyTorch module."""
    def cell(carry, xt):
        h, c = carry
        gates = xt @ w_ih.T + b_ih + h @ w_hh.T + b_hh
        i, f, g, o = jnp.split(gates, 4, axis=1)
        i = jax.nn.sigmoid(i)
        f = jax.nn.sigmoid(f)
        g = jnp.tanh(g)
        o = jax.nn.sigmoid(o)
        c = f * c + i * g
        h = o * jnp.tanh(c)
        return (h, c), h

    (hN, cN), ys = jax.lax.scan(cell, (h0, c0), x[::-1])
    return ys[::-1], (hN, cN)


if __name__ == "__main__":
    # Small shapes consistent with the module's forward.
    T, B, D, H = 8, 4, 16, 32

    key = jax.random.PRNGKey(0)
    ks = jax.random.split(key, 8)

    # Deterministic parameter init mimicking LSTMCell.__init__ (randn + bias edits).
    w_ih = jax.random.normal(ks[0], (4 * H, D), jnp.float32)
    w_hh = jax.random.normal(ks[1], (4 * H, H), jnp.float32)
    b_ih = jax.random.normal(ks[2], (4 * H,), jnp.float32)
    b_hh = jax.random.normal(ks[3], (4 * H,), jnp.float32)
    b_ih = b_ih.at[H:2 * H].set(0.0)   # bias_ih[hidden:2*hidden] = 0
    b_hh = b_hh.at[H:2 * H].set(1.0)   # bias_hh[hidden:2*hidden] = 1

    # Scale inputs a bit so gates aren't fully saturated (nicer numerics check).
    x = 0.1 * jax.random.normal(ks[4], (T, B, D), jnp.float32)
    h0 = 0.1 * jax.random.normal(ks[5], (B, H), jnp.float32)
    c0 = 0.1 * jax.random.normal(ks[6], (B, H), jnp.float32)

    y, (hN, cN) = reverse_lstm_layer(x, h0, c0, w_ih, w_hh, b_ih, b_hh)
    jax.block_until_ready((y, hN, cN))

    y_ref, (hN_ref, cN_ref) = reverse_lstm_layer_ref(
        x, h0, c0, w_ih, w_hh, b_ih, b_hh)

    assert jnp.allclose(y, y_ref, atol=1e-5, rtol=1e-5), "output mismatch"
    assert jnp.allclose(hN, hN_ref, atol=1e-5, rtol=1e-5), "final h mismatch"
    assert jnp.allclose(cN, cN_ref, atol=1e-5, rtol=1e-5), "final c mismatch"

    print("KERNEL_OK")
</pallas_src>

<mosaic_0001>
module attributes {stable_mosaic.version = 11 : i64} {
  func.func @_reverse_lstm_kernel(%arg0: i32, %arg1: memref<8x8x512xf32, #tpu.memory_space<vmem>>, %arg2: memref<8x128xf32, #tpu.memory_space<vmem>>, %arg3: memref<8x128xf32, #tpu.memory_space<vmem>>, %arg4: memref<128x512xf32, #tpu.memory_space<vmem>>, %arg5: memref<8x8x128xf32, #tpu.memory_space<vmem>>, %arg6: memref<8x128xf32, #tpu.memory_space<vmem>>, %arg7: memref<8x128xf32, #tpu.memory_space<vmem>>, %arg8: memref<8x128xf32, #tpu.memory_space<vmem>>, %arg9: memref<8x128xf32, #tpu.memory_space<vmem>>) attributes {dimension_semantics = [#tpu.dimension_semantics<arbitrary>], iteration_bounds = array<i64: 1>, scalar_prefetch = 0 : i64, scratch_operands = 2 : i64, tpu.core_type = #tpu.core_type<tc>, window_params = [{transform_indices = @transform_0, window_bounds = array<i64: 8, 8, 512>}, {pipeline_mode = #tpu.pipeline_mode<synchronous>, transform_indices = @transform_1, window_bounds = array<i64: 8, 128>}, {pipeline_mode = #tpu.pipeline_mode<synchronous>, transform_indices = @transform_2, window_bounds = array<i64: 8, 128>}, {pipeline_mode = #tpu.pipeline_mode<synchronous>, transform_indices = @transform_3, window_bounds = array<i64: 128, 512>}, {transform_indices = @transform_4, window_bounds = array<i64: 8, 8, 128>}, {pipeline_mode = #tpu.pipeline_mode<synchronous>, transform_indices = @transform_5, window_bounds = array<i64: 8, 128>}, {pipeline_mode = #tpu.pipeline_mode<synchronous>, transform_indices = @transform_6, window_bounds = array<i64: 8, 128>}]} {
    %c0_i32 = arith.constant 0 : i32
    %0 = arith.cmpi eq, %arg0, %c0_i32 : i32
    %1 = arith.extui %0 : i1 to i32
    %c0_i32_0 = arith.constant 0 : i32
    %2 = arith.cmpi ne, %1, %c0_i32_0 : i32
    scf.if %2 {
      %c0_68 = arith.constant 0 : index
      %c0_69 = arith.constant 0 : index
      %195 = vector.load %arg2[%c0_68, %c0_69] : memref<8x128xf32, #tpu.memory_space<vmem>>, vector<8x128xf32>
      %c0_70 = arith.constant 0 : index
      %c0_71 = arith.constant 0 : index
      %196 = vector.load %arg8[%c0_70, %c0_71] : memref<8x128xf32, #tpu.memory_space<vmem>>, vector<8x128xf32>
      tpu.vector_store %arg8[%c0_70, %c0_71], %195 {strides = array<i32>} : memref<8x128xf32, #tpu.memory_space<vmem>>, vector<8x128xf32>,
      %c0_72 = arith.constant 0 : index
      %c0_73 = arith.constant 0 : index
      %197 = vector.load %arg3[%c0_72, %c0_73] : memref<8x128xf32, #tpu.memory_space<vmem>>, vector<8x128xf32>
      %c0_74 = arith.constant 0 : index
      %c0_75 = arith.constant 0 : index
      %198 = vector.load %arg9[%c0_74, %c0_75] : memref<8x128xf32, #tpu.memory_space<vmem>>, vector<8x128xf32>
      tpu.vector_store %arg9[%c0_74, %c0_75], %197 {strides = array<i32>} : memref<8x128xf32, #tpu.memory_space<vmem>>, vector<8x128xf32>,
    } else {
    }
    %c0 = arith.constant 0 : index
    %c0_1 = arith.constant 0 : index
    %3 = vector.load %arg4[%c0, %c0_1] : memref<128x512xf32, #tpu.memory_space<vmem>>, vector<128x512xf32>
    %c0_2 = arith.constant 0 : index
    %c0_3 = arith.constant 0 : index
    %4 = vector.load %arg8[%c0_2, %c0_3] : memref<8x128xf32, #tpu.memory_space<vmem>>, vector<8x128xf32>
    %c0_4 = arith.constant 0 : index
    %c0_5 = arith.constant 0 : index
    %5 = vector.load %arg9[%c0_4, %c0_5] : memref<8x128xf32, #tpu.memory_space<vmem>>, vector<8x128xf32>
    %c7 = arith.constant 7 : index
    %c0_6 = arith.constant 0 : index
    %c0_7 = arith.constant 0 : index
    %6 = vector.load %arg1[%c7, %c0_6, %c0_7] : memref<8x8x512xf32, #tpu.memory_space<vmem>>, vector<1x8x512xf32>
    %7 = vector.shape_cast %6 : vector<1x8x512xf32> to vector<8x512xf32>
    %cst = arith.constant dense<0.000000e+00> : vector<8x512xf32>
    %8 = tpu.matmul %4, %3, %cst {dimension_numbers = #tpu.dot_dimension_numbers<[1], [0], [0], [1], [0, 0, 1, 1], [], []>} : vector<8x128xf32>, vector<128x512xf32>, vector<8x512xf32> -> vector<8x512xf32>
    %9 = arith.addf %7, %8 : vector<8x512xf32>
    %10 = vector.extract_strided_slice %9 {offsets = [0, 0], sizes = [8, 384], strides = [1, 1]} : vector<8x512xf32> to vector<8x384xf32>
    %11 = arith.negf %10 : vector<8x384xf32>
    %12 = math.exp %11 : vector<8x384xf32>
    %cst_8 = arith.constant 1.000000e+00 : f32
    %13 = vector.broadcast %cst_8 : f32 to vector<8x384xf32>
    %14 = arith.addf %13, %12 : vector<8x384xf32>
    %15 = arith.divf %13, %14 : vector<8x384xf32>
    %16 = vector.extract_strided_slice %15 {offsets = [0, 0], sizes = [8, 128], strides = [1, 1]} : vector<8x384xf32> to vector<8x128xf32>
    %17 = vector.extract_strided_slice %15 {offsets = [0, 128], sizes = [8, 128], strides = [1, 1]} : vector<8x384xf32> to vector<8x128xf32>
    %18 = vector.extract_strided_slice %15 {offsets = [0, 256], sizes = [8, 128], strides = [1, 1]} : vector<8x384xf32> to vector<8x128xf32>
    %19 = vector.extract_strided_slice %9 {offsets = [0, 384], sizes = [8, 128], strides = [1, 1]} : vector<8x512xf32> to vector<8x128xf32>
    %20 = math.tanh %19 : vector<8x128xf32>
    %21 = arith.mulf %17, %5 : vector<8x128xf32>
    %22 = arith.mulf %16, %20 : vector<8x128xf32>
    %23 = arith.addf %21, %22 : vector<8x128xf32>
    %24 = math.tanh %23 : vector<8x128xf32>
    %25 = arith.mulf %18, %24 : vector<8x128xf32>
    %c7_9 = arith.constant 7 : index
    %c0_10 = arith.constant 0 : index
    %c0_11 = arith.constant 0 : index
    %26 = vector.load %arg5[%c7_9, %c0_10, %c0_11] : memref<8x8x128xf32, #tpu.memory_space<vmem>>, vector<1x8x128xf32>
    %27 = vector.shape_cast %26 : vector<1x8x128xf32> to vector<8x128xf32>
    %28 = vector.shape_cast %25 : vector<8x128xf32> to vector<1x8x128xf32>
    tpu.vector_store %arg5[%c7_9, %c0_10, %c0_11], %28 {strides = array<i32>} : memref<8x8x128xf32, #tpu.memory_space<vmem>>, vector<1x8x128xf32>,
    %c6 = arith.constant 6 : index
    %c0_12 = arith.constant 0 : index
    %c0_13 = arith.constant 0 : index
    %29 = vector.load %arg1[%c6, %c0_12, %c0_13] : memref<8x8x512xf32, #tpu.memory_space<vmem>>, vector<1x8x512xf32>
    %30 = vector.shape_cast %29 : vector<1x8x512xf32> to vector<8x512xf32>
    %cst_14 = arith.constant dense<0.000000e+00> : vector<8x512xf32>
    %31 = tpu.matmul %25, %3, %cst_14 {dimension_numbers = #tpu.dot_dimension_numbers<[1], [0], [0], [1], [0, 0, 1, 1], [], []>} : vector<8x128xf32>, vector<128x512xf32>, vector<8x512xf32> -> vector<8x512xf32>
    %32 = arith.addf %30, %31 : vector<8x512xf32>
    %33 = vector.extract_strided_slice %32 {offsets = [0, 0], sizes = [8, 384], strides = [1, 1]} : vector<8x512xf32> to vector<8x384xf32>
    %34 = arith.negf %33 : vector<8x384xf32>
    %35 = math.exp %34 : vector<8x384xf32>
    %cst_15 = arith.constant 1.000000e+00 : f32
    %36 = vector.broadcast %cst_15 : f32 to vector<8x384xf32>
    %37 = arith.addf %36, %35 : vector<8x384xf32>
    %38 = arith.divf %36, %37 : vector<8x384xf32>
    %39 = vector.extract_strided_slice %38 {offsets = [0, 0], sizes = [8, 128], strides = [1, 1]} : vector<8x384xf32> to vector<8x128xf32>
    %40 = vector.extract_strided_slice %38 {offsets = [0, 128], sizes = [8, 128], strides = [1, 1]} : vector<8x384xf32> to vector<8x128xf32>
    %41 = vector.extract_strided_slice %38 {offsets = [0, 256], sizes = [8, 128], strides = [1, 1]} : vector<8x384xf32> to vector<8x128xf32>
    %42 = vector.extract_strided_slice %32 {offsets = [0, 384], sizes = [8, 128], strides = [1, 1]} : vector<8x512xf32> to vector<8x128xf32>
    %43 = math.tanh %42 : vector<8x128xf32>
    %44 = arith.mulf %40, %23 : vector<8x128xf32>
    %45 = arith.mulf %39, %43 : vector<8x128xf32>
    %46 = arith.addf %44, %45 : vector<8x128xf32>
    %47 = math.tanh %46 : vector<8x128xf32>
    %48 = arith.mulf %41, %47 : vector<8x128xf32>
    %c6_16 = arith.constant 6 : index
    %c0_17 = arith.constant 0 : index
    %c0_18 = arith.constant 0 : index
    %49 = vector.load %arg5[%c6_16, %c0_17, %c0_18] : memref<8x8x128xf32, #tpu.memory_space<vmem>>, vector<1x8x128xf32>
    %50 = vector.shape_cast %49 : vector<1x8x128xf32> to vector<8x128xf32>
    %51 = vector.shape_cast %48 : vector<8x128xf32> to vector<1x8x128xf32>
    tpu.vector_store %arg5[%c6_16, %c0_17, %c0_18], %51 {strides = array<i32>} : memref<8x8x128xf32, #tpu.memory_space<vmem>>, vector<1x8x128xf32>,
    %c5 = arith.constant 5 : index
    %c0_19 = arith.constant 0 : index
    %c0_20 = arith.constant 0 : index
    %52 = vector.load %arg1[%c5, %c0_19, %c0_20] : memref<8x8x512xf32, #tpu.memory_space<vmem>>, vector<1x8x512xf32>
    %53 = vector.shape_cast %52 : vector<1x8x512xf32> to vector<8x512xf32>
    %cst_21 = arith.constant dense<0.000000e+00> : vector<8x512xf32>
    %54 = tpu.matmul %48, %3, %cst_21 {dimension_numbers = #tpu.dot_dimension_numbers<[1], [0], [0], [1], [0, 0, 1, 1], [], []>} : vector<8x128xf32>, vector<128x512xf32>, vector<8x512xf32> -> vector<8x512xf32>
    %55 = arith.addf %53, %54 : vector<8x512xf32>
    %56 = vector.extract_strided_slice %55 {offsets = [0, 0], sizes = [8, 384], strides = [1, 1]} : vector<8x512xf32> to vector<8x384xf32>
    %57 = arith.negf %56 : vector<8x384xf32>
    %58 = math.exp %57 : vector<8x384xf32>
    %cst_22 = arith.constant 1.000000e+00 : f32
    %59 = vector.broadcast %cst_22 : f32 to vector<8x384xf32>
    %60 = arith.addf %59, %58 : vector<8x384xf32>
    %61 = arith.divf %59, %60 : vector<8x384xf32>
    %62 = vector.extract_strided_slice %61 {offsets = [0, 0], sizes = [8, 128], strides = [1, 1]} : vector<8x384xf32> to vector<8x128xf32>
    %63 = vector.extract_strided_slice %61 {offsets = [0, 128], sizes = [8, 128], strides = [1, 1]} : vector<8x384xf32> to vector<8x128xf32>
    %64 = vector.extract_strided_slice %61 {offsets = [0, 256], sizes = [8, 128], strides = [1, 1]} : vector<8x384xf32> to vector<8x128xf32>
    %65 = vector.extract_strided_slice %55 {offsets = [0, 384], sizes = [8, 128], strides = [1, 1]} : vector<8x512xf32> to vector<8x128xf32>
    %66 = math.tanh %65 : vector<8x128xf32>
    %67 = arith.mulf %63, %46 : vector<8x128xf32>
    %68 = arith.mulf %62, %66 : vector<8x128xf32>
    %69 = arith.addf %67, %68 : vector<8x128xf32>
    %70 = math.tanh %69 : vector<8x128xf32>
    %71 = arith.mulf %64, %70 : vector<8x128xf32>
    %c5_23 = arith.constant 5 : index
    %c0_24 = arith.constant 0 : index
    %c0_25 = arith.constant 0 : index
    %72 = vector.load %arg5[%c5_23, %c0_24, %c0_25] : memref<8x8x128xf32, #tpu.memory_space<vmem>>, vector<1x8x128xf32>
    %73 = vector.shape_cast %72 : vector<1x8x128xf32> to vector<8x128xf32>
    %74 = vector.shape_cast %71 : vector<8x128xf32> to vector<1x8x128xf32>
    tpu.vector_store %arg5[%c5_23, %c0_24, %c0_25], %74 {strides = array<i32>} : memref<8x8x128xf32, #tpu.memory_space<vmem>>, vector<1x8x128xf32>,
    %c4 = arith.constant 4 : index
    %c0_26 = arith.constant 0 : index
    %c0_27 = arith.constant 0 : index
    %75 = vector.load %arg1[%c4, %c0_26, %c0_27] : memref<8x8x512xf32, #tpu.memory_space<vmem>>, vector<1x8x512xf32>
    %76 = vector.shape_cast %75 : vector<1x8x512xf32> to vector<8x512xf32>
    %cst_28 = arith.constant dense<0.000000e+00> : vector<8x512xf32>
    %77 = tpu.matmul %71, %3, %cst_28 {dimension_numbers = #tpu.dot_dimension_numbers<[1], [0], [0], [1], [0, 0, 1, 1], [], []>} : vector<8x128xf32>, vector<128x512xf32>, vector<8x512xf32> -> vector<8x512xf32>
    %78 = arith.addf %76, %77 : vector<8x512xf32>
    %79 = vector.extract_strided_slice %78 {offsets = [0, 0], sizes = [8, 384], strides = [1, 1]} : vector<8x512xf32> to vector<8x384xf32>
    %80 = arith.negf %79 : vector<8x384xf32>
    %81 = math.exp %80 : vector<8x384xf32>
    %cst_29 = arith.constant 1.000000e+00 : f32
    %82 = vector.broadcast %cst_29 : f32 to vector<8x384xf32>
    %83 = arith.addf %82, %81 : vector<8x384xf32>
    %84 = arith.divf %82, %83 : vector<8x384xf32>
    %85 = vector.extract_strided_slice %84 {offsets = [0, 0], sizes = [8, 128], strides = [1, 1]} : vector<8x384xf32> to vector<8x128xf32>
    %86 = vector.extract_strided_slice %84 {offsets = [0, 128], sizes = [8, 128], strides = [1, 1]} : vector<8x384xf32> to vector<8x128xf32>
    %87 = vector.extract_strided_slice %84 {offsets = [0, 256], sizes = [8, 128], strides = [1, 1]} : vector<8x384xf32> to vector<8x128xf32>
    %88 = vector.extract_strided_slice %78 {offsets = [0, 384], sizes = [8, 128], strides = [1, 1]} : vector<8x512xf32> to vector<8x128xf32>
    %89 = math.tanh %88 : vector<8x128xf32>
    %90 = arith.mulf %86, %69 : vector<8x128xf32>
    %91 = arith.mulf %85, %89 : vector<8x128xf32>
    %92 = arith.addf %90, %91 : vector<8x128xf32>
    %93 = math.tanh %92 : vector<8x128xf32>
    %94 = arith.mulf %87, %93 : vector<8x128xf32>
    %c4_30 = arith.constant 4 : index
    %c0_31 = arith.constant 0 : index
    %c0_32 = arith.constant 0 : index
    %95 = vector.load %arg5[%c4_30, %c0_31, %c0_32] : memref<8x8x128xf32, #tpu.memory_space<vmem>>, vector<1x8x128xf32>
    %96 = vector.shape_cast %95 : vector<1x8x128xf32> to vector<8x128xf32>
    %97 = vector.shape_cast %94 : vector<8x128xf32> to vector<1x8x128xf32>
    tpu.vector_store %arg5[%c4_30, %c0_31, %c0_32], %97 {strides = array<i32>} : memref<8x8x128xf32, #tpu.memory_space<vmem>>, vector<1x8x128xf32>,
    %c3 = arith.constant 3 : index
    %c0_33 = arith.constant 0 : index
    %c0_34 = arith.constant 0 : index
    %98 = vector.load %arg1[%c3, %c0_33, %c0_34] : memref<8x8x512xf32, #tpu.memory_space<vmem>>, vector<1x8x512xf32>
    %99 = vector.shape_cast %98 : vector<1x8x512xf32> to vector<8x512xf32>
    %cst_35 = arith.constant dense<0.000000e+00> : vector<8x512xf32>
    %100 = tpu.matmul %94, %3, %cst_35 {dimension_numbers = #tpu.dot_dimension_numbers<[1], [0], [0], [1], [0, 0, 1, 1], [], []>} : vector<8x128xf32>, vector<128x512xf32>, vector<8x512xf32> -> vector<8x512xf32>
    %101 = arith.addf %99, %100 : vector<8x512xf32>
    %102 = vector.extract_strided_slice %101 {offsets = [0, 0], sizes = [8, 384], strides = [1, 1]} : vector<8x512xf32> to vector<8x384xf32>
    %103 = arith.negf %102 : vector<8x384xf32>
    %104 = math.exp %103 : vector<8x384xf32>
    %cst_36 = arith.constant 1.000000e+00 : f32
    %105 = vector.broadcast %cst_36 : f32 to vector<8x384xf32>
    %106 = arith.addf %105, %104 : vector<8x384xf32>
    %107 = arith.divf %105, %106 : vector<8x384xf32>
    %108 = vector.extract_strided_slice %107 {offsets = [0, 0], sizes = [8, 128], strides = [1, 1]} : vector<8x384xf32> to vector<8x128xf32>
    %109 = vector.extract_strided_slice %107 {offsets = [0, 128], sizes = [8, 128], strides = [1, 1]} : vector<8x384xf32> to vector<8x128xf32>
    %110 = vector.extract_strided_slice %107 {offsets = [0, 256], sizes = [8, 128], strides = [1, 1]} : vector<8x384xf32> to vector<8x128xf32>
    %111 = vector.extract_strided_slice %101 {offsets = [0, 384], sizes = [8, 128], strides = [1, 1]} : vector<8x512xf32> to vector<8x128xf32>
    %112 = math.tanh %111 : vector<8x128xf32>
    %113 = arith.mulf %109, %92 : vector<8x128xf32>
    %114 = arith.mulf %108, %112 : vector<8x128xf32>
    %115 = arith.addf %113, %114 : vector<8x128xf32>
    %116 = math.tanh %115 : vector<8x128xf32>
    %117 = arith.mulf %110, %116 : vector<8x128xf32>
    %c3_37 = arith.constant 3 : index
    %c0_38 = arith.constant 0 : index
    %c0_39 = arith.constant 0 : index
    %118 = vector.load %arg5[%c3_37, %c0_38, %c0_39] : memref<8x8x128xf32, #tpu.memory_space<vmem>>, vector<1x8x128xf32>
    %119 = vector.shape_cast %118 : vector<1x8x128xf32> to vector<8x128xf32>
    %120 = vector.shape_cast %117 : vector<8x128xf32> to vector<1x8x128xf32>
    tpu.vector_store %arg5[%c3_37, %c0_38, %c0_39], %120 {strides = array<i32>} : memref<8x8x128xf32, #tpu.memory_space<vmem>>, vector<1x8x128xf32>,
    %c2 = arith.constant 2 : index
    %c0_40 = arith.constant 0 : index
    %c0_41 = arith.constant 0 : index
    %121 = vector.load %arg1[%c2, %c0_40, %c0_41] : memref<8x8x512xf32, #tpu.memory_space<vmem>>, vector<1x8x512xf32>
    %122 = vector.shape_cast %121 : vector<1x8x512xf32> to vector<8x512xf32>
    %cst_42 = arith.constant dense<0.000000e+00> : vector<8x512xf32>
    %123 = tpu.matmul %117, %3, %cst_42 {dimension_numbers = #tpu.dot_dimension_numbers<[1], [0], [0], [1], [0, 0, 1, 1], [], []>} : vector<8x128xf32>, vector<128x512xf32>, vector<8x512xf32> -> vector<8x512xf32>
    %124 = arith.addf %122, %123 : vector<8x512xf32>
    %125 = vector.extract_strided_slice %124 {offsets = [0, 0], sizes = [8, 384], strides = [1, 1]} : vector<8x512xf32> to vector<8x384xf32>
    %126 = arith.negf %125 : vector<8x384xf32>
    %127 = math.exp %126 : vector<8x384xf32>
    %cst_43 = arith.constant 1.000000e+00 : f32
    %128 = vector.broadcast %cst_43 : f32 to vector<8x384xf32>
    %129 = arith.addf %128, %127 : vector<8x384xf32>
    %130 = arith.divf %128, %129 : vector<8x384xf32>
    %131 = vector.extract_strided_slice %130 {offsets = [0, 0], sizes = [8, 128], strides = [1, 1]} : vector<8x384xf32> to vector<8x128xf32>
    %132 = vector.extract_strided_slice %130 {offsets = [0, 128], sizes = [8, 128], strides = [1, 1]} : vector<8x384xf32> to vector<8x128xf32>
    %133 = vector.extract_strided_slice %130 {offsets = [0, 256], sizes = [8, 128], strides = [1, 1]} : vector<8x384xf32> to vector<8x128xf32>
    %134 = vector.extract_strided_slice %124 {offsets = [0, 384], sizes = [8, 128], strides = [1, 1]} : vector<8x512xf32> to vector<8x128xf32>
    %135 = math.tanh %134 : vector<8x128xf32>
    %136 = arith.mulf %132, %115 : vector<8x128xf32>
    %137 = arith.mulf %131, %135 : vector<8x128xf32>
    %138 = arith.addf %136, %137 : vector<8x128xf32>
    %139 = math.tanh %138 : vector<8x128xf32>
    %140 = arith.mulf %133, %139 : vector<8x128xf32>
    %c2_44 = arith.constant 2 : index
    %c0_45 = arith.constant 0 : index
    %c0_46 = arith.constant 0 : index
    %141 = vector.load %arg5[%c2_44, %c0_45, %c0_46] : memref<8x8x128xf32, #tpu.memory_space<vmem>>, vector<1x8x128xf32>
    %142 = vector.shape_cast %141 : vector<1x8x128xf32> to vector<8x128xf32>
    %143 = vector.shape_cast %140 : vector<8x128xf32> to vector<1x8x128xf32>
    tpu.vector_store %arg5[%c2_44, %c0_45, %c0_46], %143 {strides = array<i32>} : memref<8x8x128xf32, #tpu.memory_space<vmem>>, vector<1x8x128xf32>,
    %c1 = arith.constant 1 : index
    %c0_47 = arith.constant 0 : index
    %c0_48 = arith.constant 0 : index
    %144 = vector.load %arg1[%c1, %c0_47, %c0_48] : memref<8x8x512xf32, #tpu.memory_space<vmem>>, vector<1x8x512xf32>
    %145 = vector.shape_cast %144 : vector<1x8x512xf32> to vector<8x512xf32>
    %cst_49 = arith.constant dense<0.000000e+00> : vector<8x512xf32>
    %146 = tpu.matmul %140, %3, %cst_49 {dimension_numbers = #tpu.dot_dimension_numbers<[1], [0], [0], [1], [0, 0, 1, 1], [], []>} : vector<8x128xf32>, vector<128x512xf32>, vector<8x512xf32> -> vector<8x512xf32>
    %147 = arith.addf %145, %146 : vector<8x512xf32>
    %148 = vector.extract_strided_slice %147 {offsets = [0, 0], sizes = [8, 384], strides = [1, 1]} : vector<8x512xf32> to vector<8x384xf32>
    %149 = arith.negf %148 : vector<8x384xf32>
    %150 = math.exp %149 : vector<8x384xf32>
    %cst_50 = arith.constant 1.000000e+00 : f32
    %151 = vector.broadcast %cst_50 : f32 to vector<8x384xf32>
    %152 = arith.addf %151, %150 : vector<8x384xf32>
    %153 = arith.divf %151, %152 : vector<8x384xf32>
    %154 = vector.extract_strided_slice %153 {offsets = [0, 0], sizes = [8, 128], strides = [1, 1]} : vector<8x384xf32> to vector<8x128xf32>
    %155 = vector.extract_strided_slice %153 {offsets = [0, 128], sizes = [8, 128], strides = [1, 1]} : vector<8x384xf32> to vector<8x128xf32>
    %156 = vector.extract_strided_slice %153 {offsets = [0, 256], sizes = [8, 128], strides = [1, 1]} : vector<8x384xf32> to vector<8x128xf32>
    %157 = vector.extract_strided_slice %147 {offsets = [0, 384], sizes = [8, 128], strides = [1, 1]} : vector<8x512xf32> to vector<8x128xf32>
    %158 = math.tanh %157 : vector<8x128xf32>
    %159 = arith.mulf %155, %138 : vector<8x128xf32>
    %160 = arith.mulf %154, %158 : vector<8x128xf32>
    %161 = arith.addf %159, %160 : vector<8x128xf32>
    %162 = math.tanh %161 : vector<8x128xf32>
    %163 = arith.mulf %156, %162 : vector<8x128xf32>
    %c1_51 = arith.constant 1 : index
    %c0_52 = arith.constant 0 : index
    %c0_53 = arith.constant 0 : index
    %164 = vector.load %arg5[%c1_51, %c0_52, %c0_53] : memref<8x8x128xf32, #tpu.memory_space<vmem>>, vector<1x8x128xf32>
    %165 = vector.shape_cast %164 : vector<1x8x128xf32> to vector<8x128xf32>
    %166 = vector.shape_cast %163 : vector<8x128xf32> to vector<1x8x128xf32>
    tpu.vector_store %arg5[%c1_51, %c0_52, %c0_53], %166 {strides = array<i32>} : memref<8x8x128xf32, #tpu.memory_space<vmem>>, vector<1x8x128xf32>,
    %c0_54 = arith.constant 0 : index
    %c0_55 = arith.constant 0 : index
    %c0_56 = arith.constant 0 : index
    %167 = vector.load %arg1[%c0_54, %c0_55, %c0_56] : memref<8x8x512xf32, #tpu.memory_space<vmem>>, vector<1x8x512xf32>
    %168 = vector.shape_cast %167 : vector<1x8x512xf32> to vector<8x512xf32>
    %cst_57 = arith.constant dense<0.000000e+00> : vector<8x512xf32>
    %169 = tpu.matmul %163, %3, %cst_57 {dimension_numbers = #tpu.dot_dimension_numbers<[1], [0], [0], [1], [0, 0, 1, 1], [], []>} : vector<8x128xf32>, vector<128x512xf32>, vector<8x512xf32> -> vector<8x512xf32>
    %170 = arith.addf %168, %169 : vector<8x512xf32>
    %171 = vector.extract_strided_slice %170 {offsets = [0, 0], sizes = [8, 384], strides = [1, 1]} : vector<8x512xf32> to vector<8x384xf32>
    %172 = arith.negf %171 : vector<8x384xf32>
    %173 = math.exp %172 : vector<8x384xf32>
    %cst_58 = arith.constant 1.000000e+00 : f32
    %174 = vector.broadcast %cst_58 : f32 to vector<8x384xf32>
    %175 = arith.addf %174, %173 : vector<8x384xf32>
    %176 = arith.divf %174, %175 : vector<8x384xf32>
    %177 = vector.extract_strided_slice %176 {offsets = [0, 0], sizes = [8, 128], strides = [1, 1]} : vector<8x384xf32> to vector<8x128xf32>
    %178 = vector.extract_strided_slice %176 {offsets = [0, 128], sizes = [8, 128], strides = [1, 1]} : vector<8x384xf32> to vector<8x128xf32>
    %179 = vector.extract_strided_slice %176 {offsets = [0, 256], sizes = [8, 128], strides = [1, 1]} : vector<8x384xf32> to vector<8x128xf32>
    %180 = vector.extract_strided_slice %170 {offsets = [0, 384], sizes = [8, 128], strides = [1, 1]} : vector<8x512xf32> to vector<8x128xf32>
    %181 = math.tanh %180 : vector<8x128xf32>
    %182 = arith.mulf %178, %161 : vector<8x128xf32>
    %183 = arith.mulf %177, %181 : vector<8x128xf32>
    %184 = arith.addf %182, %183 : vector<8x128xf32>
    %185 = math.tanh %184 : vector<8x128xf32>
    %186 = arith.mulf %179, %185 : vector<8x128xf32>
    %c0_59 = arith.constant 0 : index
    %c0_60 = arith.constant 0 : index
    %c0_61 = arith.constant 0 : index
    %187 = vector.load %arg5[%c0_59, %c0_60, %c0_61] : memref<8x8x128xf32, #tpu.memory_space<vmem>>, vector<1x8x128xf32>
    %188 = vector.shape_cast %187 : vector<1x8x128xf32> to vector<8x128xf32>
    %189 = vector.shape_cast %186 : vector<8x128xf32> to vector<1x8x128xf32>
    tpu.vector_store %arg5[%c0_59, %c0_60, %c0_61], %189 {strides = array<i32>} : memref<8x8x128xf32, #tpu.memory_space<vmem>>, vector<1x8x128xf32>,
    %c0_62 = arith.constant 0 : index
    %c0_63 = arith.constant 0 : index
    %190 = vector.load %arg8[%c0_62, %c0_63] : memref<8x128xf32, #tpu.memory_space<vmem>>, vector<8x128xf32>
    tpu.vector_store %arg8[%c0_62, %c0_63], %186 {strides = array<i32>} : memref<8x128xf32, #tpu.memory_space<vmem>>, vector<8x128xf32>,
    %c0_64 = arith.constant 0 : index
    %c0_65 = arith.constant 0 : index
    %191 = vector.load %arg9[%c0_64, %c0_65] : memref<8x128xf32, #tpu.memory_space<vmem>>, vector<8x128xf32>
    tpu.vector_store %arg9[%c0_64, %c0_65], %184 {strides = array<i32>} : memref<8x128xf32, #tpu.memory_space<vmem>>, vector<8x128xf32>,
    %c0_i32_66 = arith.constant 0 : i32
    %192 = arith.cmpi eq, %arg0, %c0_i32_66 : i32
    %193 = arith.extui %192 : i1 to i32
    %c0_i32_67 = arith.constant 0 : i32
    %194 = arith.cmpi ne, %193, %c0_i32_67 : i32
    scf.if %194 {
      %c0_68 = arith.constant 0 : index
      %c0_69 = arith.constant 0 : index
      %195 = vector.load %arg6[%c0_68, %c0_69] : memref<8x128xf32, #tpu.memory_space<vmem>>, vector<8x128xf32>
      tpu.vector_store %arg6[%c0_68, %c0_69], %186 {strides = array<i32>} : memref<8x128xf32, #tpu.memory_space<vmem>>, vector<8x128xf32>,
      %c0_70 = arith.constant 0 : index
      %c0_71 = arith.constant 0 : index
      %196 = vector.load %arg7[%c0_70, %c0_71] : memref<8x128xf32, #tpu.memory_space<vmem>>, vector<8x128xf32>
      tpu.vector_store %arg7[%c0_70, %c0_71], %184 {strides = array<i32>} : memref<8x128xf32, #tpu.memory_space<vmem>>, vector<8x128xf32>,
    } else {
    }
    return
  }
  func.func @transform_0(%arg0: i32) -> (i32, i32, i32) {
    %c0_i32 = arith.constant 0 : i32
    %0 = arith.subi %c0_i32, %arg0 : i32
    %c0_i32_0 = arith.constant 0 : i32
    %c0_i32_1 = arith.constant 0 : i32
    %c0_i32_2 = arith.constant 0 : i32
    return %0, %c0_i32_0, %c0_i32_1 : i32, i32, i32
  }
  func.func @transform_1(%arg0: i32) -> (i32, i32) {
    %c0_i32 = arith.constant 0 : i32
    %c0_i32_0 = arith.constant 0 : i32
    %c0_i32_1 = arith.constant 0 : i32
    return %c0_i32, %c0_i32_0 : i32, i32
  }
  func.func @transform_2(%arg0: i32) -> (i32, i32) {
    %c0_i32 = arith.constant 0 : i32
    %c0_i32_0 = arith.constant 0 : i32
    %c0_i32_1 = arith.constant 0 : i32
    return %c0_i32, %c0_i32_0 : i32, i32
  }
  func.func @transform_3(%arg0: i32) -> (i32, i32) {
    %c0_i32 = arith.constant 0 : i32
    %c0_i32_0 = arith.constant 0 : i32
    %c0_i32_1 = arith.constant 0 : i32
    return %c0_i32, %c0_i32_0 : i32, i32
  }
  func.func @transform_4(%arg0: i32) -> (i32, i32, i32) {
    %c0_i32 = arith.constant 0 : i32
    %0 = arith.subi %c0_i32, %arg0 : i32
    %c0_i32_0 = arith.constant 0 : i32
    %c0_i32_1 = arith.constant 0 : i32
    %c0_i32_2 = arith.constant 0 : i32
    return %0, %c0_i32_0, %c0_i32_1 : i32, i32, i32
  }
  func.func @transform_5(%arg0: i32) -> (i32, i32) {
    %c0_i32 = arith.constant 0 : i32
    %c0_i32_0 = arith.constant 0 : i32
    %c0_i32_1 = arith.constant 0 : i32
    return %c0_i32, %c0_i32_0 : i32, i32
  }
  func.func @transform_6(%arg0: i32) -> (i32, i32) {
    %c0_i32 = arith.constant 0 : i32
    %c0_i32_0 = arith.constant 0 : i32
    %c0_i32_1 = arith.constant 0 : i32
    return %c0_i32, %c0_i32_0 : i32, i32
  }
}

</mosaic_0001>

<llo_original>
// kernel: tpu_custom_call.1
$region0: #{tpu_custom_call.1}
  #allocation0 [shape = 'u32[]', space=smem, size = 0x4, offset = 0x4, fixed_abs, tag = 'smem constant byte address 0x4 - core index']
  #allocation1 [shape = 'u32[72,128]{1,0:T(1,128)}', space=vmem, size = 0x9000, scoped, tag = 'internal scratch']
  #allocation2 [shape = 'f32[8,128]{1,0:T(8,128)}', space=vmem, size = 0x1000, scoped, tag = 'scratch operand']
  #allocation3 [shape = 'f32[8,128]{1,0:T(8,128)}', space=vmem, size = 0x1000, scoped, tag = 'scratch operand']
  %s0 = inlined_call_operand.hbm [shape: f32[8,8,512], index: 0, kind: input, shape index: {}]
  %s1 = inlined_call_operand.hbm [shape: f32[8,128], index: 1, kind: input, shape index: {}]
  %s2 = inlined_call_operand.hbm [shape: f32[8,128], index: 2, kind: input, shape index: {}]
  %s3 = inlined_call_operand.hbm [shape: f32[128,512], index: 3, kind: input, shape index: {}]
  %s4 = inlined_call_operand.hbm [shape: f32[8,8,128], index: 4, kind: output, shape index: {0}]
  %s5 = inlined_call_operand.hbm [shape: f32[8,128], index: 5, kind: output, shape index: {1}]
  %s6 = inlined_call_operand.hbm [shape: f32[8,128], index: 6, kind: output, shape index: {2}]
  %7 = xla_tuple %s4, %s5, %s6
  %s8 = sld [smem:[#allocation0]]
  $region66: #{tpu_custom_call.1} parent=0
    _
  %s10 = ssub.s32 1, %s8
  %s11 = scalar_select 0, %s10, %s8
  $region1: #{tpu_custom_call.1} parent=0
    #allocation4 [shape = 'u8[131072]{0}', space=vmem, size = 0x20000, scoped, tag = 'input window, operand 0, single buffered']
    #allocation5 [shape = 's32[1]{0}', space=sflag, size = 0x4, scoped, tag = 'scoped memory for tpu_custom_call.1']
    #allocation6 [shape = 's32[1]{0}', space=sflag, size = 0x4, scoped, tag = 'scoped memory for tpu_custom_call.1']
    #allocation7 [shape = 'u8[4096]{0}', space=vmem, size = 0x1000, scoped, tag = 'input window, operand 1, single buffered']
    #allocation8 [shape = 's32[1]{0}', space=sflag, size = 0x4, scoped, tag = 'scoped memory for tpu_custom_call.1']
    #allocation9 [shape = 'u8[4096]{0}', space=vmem, size = 0x1000, scoped, tag = 'input window, operand 2, single buffered']
    #allocation10 [shape = 'u8[262144]{0}', space=vmem, size = 0x40000, scoped, tag = 'input window, operand 3, single buffered']
    #allocation11 [shape = 's32[1]{0}', space=sflag, size = 0x4, scoped, tag = 'scoped memory for tpu_custom_call.1']
    #allocation12 [shape = 'u8[32768]{0}', space=vmem, size = 0x8000, scoped, tag = 'output window, operand 0, single buffered']
    #allocation13 [shape = 'u8[4096]{0}', space=vmem, size = 0x1000, scoped, tag = 'output window, operand 1, single buffered']
    #allocation14 [shape = 's32[1]{0}', space=sflag, size = 0x4, scoped, tag = 'scoped memory for tpu_custom_call.1']
    #allocation15 [shape = 'u8[4096]{0}', space=vmem, size = 0x1000, scoped, tag = 'output window, operand 2, single buffered']
    %12 = vsyncpa [#allocation5], 0
    %13 = vsyncpa [#allocation8], 0
    %14 = vsyncpa [#allocation11], 0
    %15 = vsyncpa [#allocation6], 0
    %16 = vsyncpa [#allocation14], 0
    // Predicated region
    $region2: #{tpu_custom_call.1} parent=1 // pred_check
      _
    $region3: #{tpu_custom_call.1} parent=1 // pred_check_branch
      %18 = sbr.rel (0) target = $region5
    $region4: #{tpu_custom_call.1} parent=1 // pred_region
      %s19 = ssub.s32 0, 0
      %s20 = smul.u32 8, %s19
      %22 = vsyncadd [#allocation5], 0
      %s23 = smul.addr %s20, 4
      %s24 = smul.addr %s23, 8
      %s25 = scalar_lea.hbm %s0, %s24
      %s26 = sshll.u32 %s25, 4
      %s27 = int_to_ptr.hbm [resolvable:$true] %s26
      %s28 = sshll.u32 [#allocation4], 4
      %s29 = int_to_ptr.vmem [resolvable:$true] %s28
      %34 = dma.hbm_to_vmem [thread:$0]  %s27, 4096, %s29, [#allocation5], 512, 512, 32
    $region5: #{tpu_custom_call.1} parent=1 // pred_fallthru
      _
    // Predicated region
    $region6: #{tpu_custom_call.1} parent=1 // pred_check
      _
    $region7: #{tpu_custom_call.1} parent=1 // pred_check_branch
      %36 = sbr.rel (0) target = $region9
    $region8: #{tpu_custom_call.1} parent=1 // pred_region
      %38 = vsyncadd [#allocation8], 0
      %s40 = sshll.u32 %s1, 4
      %s41 = int_to_ptr.hbm [resolvable:$true] %s40
      %s42 = sshll.u32 [#allocation7], 4
      %s43 = int_to_ptr.vmem [resolvable:$true] %s42
      %45 = dma.hbm_to_vmem [thread:$0]  %s41, 128, %s43, [#allocation8]
    $region9: #{tpu_custom_call.1} parent=1 // pred_fallthru
      _
    // Predicated region
    $region10: #{tpu_custom_call.1} parent=1 // pred_check
      _
    $region11: #{tpu_custom_call.1} parent=1 // pred_check_branch
      %47 = sbr.rel (0) target = $region13
    $region12: #{tpu_custom_call.1} parent=1 // pred_region
      %49 = vsyncadd [#allocation8], 0
      %s51 = sshll.u32 %s2, 4
      %s52 = int_to_ptr.hbm [resolvable:$true] %s51
      %s53 = sshll.u32 [#allocation9], 4
      %s54 = int_to_ptr.vmem [resolvable:$true] %s53
      %56 = dma.hbm_to_vmem [thread:$0]  %s52, 128, %s54, [#allocation8]
    $region13: #{tpu_custom_call.1} parent=1 // pred_fallthru
      _
    // Predicated region
    $region14: #{tpu_custom_call.1} parent=1 // pred_check
      _
    $region15: #{tpu_custom_call.1} parent=1 // pred_check_branch
      %58 = sbr.rel (0) target = $region17
    $region16: #{tpu_custom_call.1} parent=1 // pred_region
      %60 = vsyncadd [#allocation11], 0
      %s61 = sshll.u32 %s3, 4
      %s62 = int_to_ptr.hbm [resolvable:$true] %s61
      %s63 = sshll.u32 [#allocation10], 4
      %s64 = int_to_ptr.vmem [resolvable:$true] %s63
      %69 = dma.hbm_to_vmem [thread:$0]  %s62, 8192, %s64, [#allocation11], 512, 512, 32
    $region17: #{tpu_custom_call.1} parent=1 // pred_fallthru
      _
    // Predicated region
    $region18: #{tpu_custom_call.1} parent=1 // pred_check
      _
    $region19: #{tpu_custom_call.1} parent=1 // pred_check_branch
      %71 = sbr.rel (0) target = $region21
    $region20: #{tpu_custom_call.1} parent=1 // pred_region
      %73 = dma.done [#allocation5], 4096
    $region21: #{tpu_custom_call.1} parent=1 // pred_fallthru
      _
    // Predicated region
    $region22: #{tpu_custom_call.1} parent=1 // pred_check
      _
    $region23: #{tpu_custom_call.1} parent=1 // pred_check_branch
      %75 = sbr.rel (0) target = $region25
    $region24: #{tpu_custom_call.1} parent=1 // pred_region
      %77 = dma.done [#allocation8], 128
    $region25: #{tpu_custom_call.1} parent=1 // pred_fallthru
      _
    // Predicated region
    $region26: #{tpu_custom_call.1} parent=1 // pred_check
      _
    $region27: #{tpu_custom_call.1} parent=1 // pred_check_branch
      %79 = sbr.rel (0) target = $region29
    $region28: #{tpu_custom_call.1} parent=1 // pred_region
      %81 = dma.done [#allocation8], 128
    $region29: #{tpu_custom_call.1} parent=1 // pred_fallthru
      _
    // Predicated region
    $region30: #{tpu_custom_call.1} parent=1 // pred_check
      _
    $region31: #{tpu_custom_call.1} parent=1 // pred_check_branch
      %83 = sbr.rel (0) target = $region33
    $region32: #{tpu_custom_call.1} parent=1 // pred_region
      %85 = dma.done [#allocation11], 8192
    $region33: #{tpu_custom_call.1} parent=1 // pred_fallthru
      _
    %s86 = ssub.s32 0, 0
    %s87 = smul.u32 8, %s86
    %s88 = ssub.s32 0, 0
    %s89 = smul.u32 8, %s88
    %p90 = scmp.eq.s32.totalorder 0, 0
    // Predicated region
    $region34: #{tpu_custom_call.1} parent=1 // pred_check
      %p91 = pneg %p90
    $region35: #{tpu_custom_call.1} parent=1 // pred_check_branch
      %93 = sbr.rel (%p91) target = $region37
    $region36: #{tpu_custom_call.1} parent=1 // pred_region
      %v94 = vld [vmem:[#allocation7] sm:$0xff]
      %95 = vst [vmem:[#allocation2] sm:$0xff] %v94
      %v96 = vld [vmem:[#allocation9] sm:$0xff]
      %97 = vst [vmem:[#allocation3] sm:$0xff] %v96
    $region37: #{tpu_custom_call.1} parent=1 // pred_fallthru
      _
    %v98 = vld [vmem:[#allocation10] sm:$0xff]
    %v99 = vld [vmem:[#allocation10 + $0x8] sm:$0xff]
    %v100 = vld [vmem:[#allocation10 + $0x10] sm:$0xff]
    %v101 = vld [vmem:[#allocation10 + $0x18] sm:$0xff]
    %v102 = vld [vmem:[#allocation10 + $0x20] sm:$0xff]
    %v103 = vld [vmem:[#allocation10 + $0x28] sm:$0xff]
    %v104 = vld [vmem:[#allocation10 + $0x30] sm:$0xff]
    %v105 = vld [vmem:[#allocation10 + $0x38] sm:$0xff]
    %v106 = vld [vmem:[#allocation10 + $0x40] sm:$0xff]
    %v107 = vld [vmem:[#allocation10 + $0x48] sm:$0xff]
    %v108 = vld [vmem:[#allocation10 + $0x50] sm:$0xff]
    %v109 = vld [vmem:[#allocation10 + $0x58] sm:$0xff]
    %v110 = vld [vmem:[#allocation10 + $0x60] sm:$0xff]
    %v111 = vld [vmem:[#allocation10 + $0x68] sm:$0xff]
    %v112 = vld [vmem:[#allocation10 + $0x70] sm:$0xff]
    %v113 = vld [vmem:[#allocation10 + $0x78] sm:$0xff]
    %v114 = vld [vmem:[#allocation10 + $0x80] sm:$0xff]
    %v115 = vld [vmem:[#allocation10 + $0x88] sm:$0xff]
    %v116 = vld [vmem:[#allocation10 + $0x90] sm:$0xff]
    %v117 = vld [vmem:[#allocation10 + $0x98] sm:$0xff]
    %v118 = vld [vmem:[#allocation10 + $0xa0] sm:$0xff]
    %v119 = vld [vmem:[#allocation10 + $0xa8] sm:$0xff]
    %v120 = vld [vmem:[#allocation10 + $0xb0] sm:$0xff]
    %v121 = vld [vmem:[#allocation10 + $0xb8] sm:$0xff]
    %v122 = vld [vmem:[#allocation10 + $0xc0] sm:$0xff]
    %v123 = vld [vmem:[#allocation10 + $0xc8] sm:$0xff]
    %v124 = vld [vmem:[#allocation10 + $0xd0] sm:$0xff]
    %v125 = vld [vmem:[#allocation10 + $0xd8] sm:$0xff]
    %v126 = vld [vmem:[#allocation10 + $0xe0] sm:$0xff]
    %v127 = vld [vmem:[#allocation10 + $0xe8] sm:$0xff]
    %v128 = vld [vmem:[#allocation10 + $0xf0] sm:$0xff]
    %v129 = vld [vmem:[#allocation10 + $0xf8] sm:$0xff]
    %v130 = vld [vmem:[#allocation10 + $0x100] sm:$0xff]
    %v131 = vld [vmem:[#allocation10 + $0x108] sm:$0xff]
    %v132 = vld [vmem:[#allocation10 + $0x110] sm:$0xff]
    %v133 = vld [vmem:[#allocation10 + $0x118] sm:$0xff]
    %v134 = vld [vmem:[#allocation10 + $0x120] sm:$0xff]
    %v135 = vld [vmem:[#allocation10 + $0x128] sm:$0xff]
    %v136 = vld [vmem:[#allocation10 + $0x130] sm:$0xff]
    %v137 = vld [vmem:[#allocation10 + $0x138] sm:$0xff]
    %v138 = vld [vmem:[#allocation10 + $0x140] sm:$0xff]
    %v139 = vld [vmem:[#allocation10 + $0x148] sm:$0xff]
    %v140 = vld [vmem:[#allocation10 + $0x150] sm:$0xff]
    %v141 = vld [vmem:[#allocation10 + $0x158] sm:$0xff]
    %v142 = vld [vmem:[#allocation10 + $0x160] sm:$0xff]
    %v143 = vld [vmem:[#allocation10 + $0x168] sm:$0xff]
    %v144 = vld [vmem:[#allocation10 + $0x170] sm:$0xff]
    %v145 = vld [vmem:[#allocation10 + $0x178] sm:$0xff]
    %v146 = vld [vmem:[#allocation10 + $0x180] sm:$0xff]
    %v147 = vld [vmem:[#allocation10 + $0x188] sm:$0xff]
    %v148 = vld [vmem:[#allocation10 + $0x190] sm:$0xff]
    %v149 = vld [vmem:[#allocation10 + $0x198] sm:$0xff]
    %v150 = vld [vmem:[#allocation10 + $0x1a0] sm:$0xff]
    %v151 = vld [vmem:[#allocation10 + $0x1a8] sm:$0xff]
    %v152 = vld [vmem:[#allocation10 + $0x1b0] sm:$0xff]
    %v153 = vld [vmem:[#allocation10 + $0x1b8] sm:$0xff]
    %v154 = vld [vmem:[#allocation10 + $0x1c0] sm:$0xff]
    %v155 = vld [vmem:[#allocation10 + $0x1c8] sm:$0xff]
    %v156 = vld [vmem:[#allocation10 + $0x1d0] sm:$0xff]
    %v157 = vld [vmem:[#allocation10 + $0x1d8] sm:$0xff]
    %v158 = vld [vmem:[#allocation10 + $0x1e0] sm:$0xff]
    %v159 = vld [vmem:[#allocation10 + $0x1e8] sm:$0xff]
    %v160 = vld [vmem:[#allocation10 + $0x1f0] sm:$0xff]
    %v161 = vld [vmem:[#allocation10 + $0x1f8] sm:$0xff]
    %v162 = vld [vmem:[#allocation2] sm:$0xff]
    %v163 = vld [vmem:[#allocation3] sm:$0xff]
    %s164 = scalar_lea.vmem [#allocation4], 224
    %v165 = vld [vmem:[%s164] sm:$0xff]
    %v166 = vld [vmem:[%s164 + $0x8] sm:$0xff]
    %v167 = vld [vmem:[%s164 + $0x10] sm:$0xff]
    %v168 = vld [vmem:[%s164 + $0x18] sm:$0xff]
    %169 = vmatpush.msra.mxu0 %v158
    %170 = vmatpush.msra.mxu0 %v154
    %171 = vmatpush.msra.mxu0 %v150
    %172 = vmatpush.msra.mxu0 %v146
    %173 = vmatpush.msra.mxu0 %v142
    %174 = vmatpush.msra.mxu0 %v138
    %175 = vmatpush.msra.mxu0 %v134
    %176 = vmatpush.msra.mxu0 %v130
    %177 = vmatpush.msra.mxu0 %v126
    %178 = vmatpush.msra.mxu0 %v122
    %179 = vmatpush.msra.mxu0 %v118
    %180 = vmatpush.msra.mxu0 %v114
    %181 = vmatpush.msra.mxu0 %v110
    %182 = vmatpush.msra.mxu0 %v106
    %183 = vmatpush.msra.mxu0 %v102
    %184 = vmatpush.msra.mxu0 %v98
    %185 = vmatmul.f32.gmra.mxu0 %v162
    %v186 = vpop.f32.mrf.mxu0
    %v187 = vadd.f32 0.0, %v186
    %188 = vdwg.mxu0
    %189 = vmatpush.msra.mxu0 %v159
    %190 = vmatpush.msra.mxu0 %v155
    %191 = vmatpush.msra.mxu0 %v151
    %192 = vmatpush.msra.mxu0 %v147
    %193 = vmatpush.msra.mxu0 %v143
    %194 = vmatpush.msra.mxu0 %v139
    %195 = vmatpush.msra.mxu0 %v135
    %196 = vmatpush.msra.mxu0 %v131
    %197 = vmatpush.msra.mxu0 %v127
    %198 = vmatpush.msra.mxu0 %v123
    %199 = vmatpush.msra.mxu0 %v119
    %200 = vmatpush.msra.mxu0 %v115
    %201 = vmatpush.msra.mxu0 %v111
    %202 = vmatpush.msra.mxu0 %v107
    %203 = vmatpush.msra.mxu0 %v103
    %204 = vmatpush.msra.mxu0 %v99
    %205 = vmatmul.f32.gmra.mxu0 %v162
    %v206 = vpop.f32.mrf.mxu0
    %v207 = vadd.f32 0.0, %v206
    %208 = vdwg.mxu0
    %209 = vmatpush.msra.mxu0 %v160
    %210 = vmatpush.msra.mxu0 %v156
    %211 = vmatpush.msra.mxu0 %v152
    %212 = vmatpush.msra.mxu0 %v148
    %213 = vmatpush.msra.mxu0 %v144
    %214 = vmatpush.msra.mxu0 %v140
    %215 = vmatpush.msra.mxu0 %v136
    %216 = vmatpush.msra.mxu0 %v132
    %217 = vmatpush.msra.mxu0 %v128
    %218 = vmatpush.msra.mxu0 %v124
    %219 = vmatpush.msra.mxu0 %v120
    %220 = vmatpush.msra.mxu0 %v116
    %221 = vmatpush.msra.mxu0 %v112
    %222 = vmatpush.msra.mxu0 %v108
    %223 = vmatpush.msra.mxu0 %v104
    %224 = vmatpush.msra.mxu0 %v100
    %225 = vmatmul.f32.gmra.mxu0 %v162
    %v226 = vpop.f32.mrf.mxu0
    %v227 = vadd.f32 0.0, %v226
    %228 = vdwg.mxu0
    %229 = vmatpush.msra.mxu0 %v161
    %230 = vmatpush.msra.mxu0 %v157
    %231 = vmatpush.msra.mxu0 %v153
    %232 = vmatpush.msra.mxu0 %v149
    %233 = vmatpush.msra.mxu0 %v145
    %234 = vmatpush.msra.mxu0 %v141
    %235 = vmatpush.msra.mxu0 %v137
    %236 = vmatpush.msra.mxu0 %v133
    %237 = vmatpush.msra.mxu0 %v129
    %238 = vmatpush.msra.mxu0 %v125
    %239 = vmatpush.msra.mxu0 %v121
    %240 = vmatpush.msra.mxu0 %v117
    %241 = vmatpush.msra.mxu0 %v113
    %242 = vmatpush.msra.mxu0 %v109
    %243 = vmatpush.msra.mxu0 %v105
    %244 = vmatpush.msra.mxu0 %v101
    %245 = vmatmul.f32.gmra.mxu0 %v162
    %v246 = vpop.f32.mrf.mxu0
    %v247 = vadd.f32 0.0, %v246
    %248 = vdwg.mxu0
    %v249 = vadd.f32 %v165, %v187
    %v250 = vadd.f32 %v166, %v207
    %v251 = vadd.f32 %v167, %v227
    %v252 = vadd.f32 %v168, %v247
    %v253 = vxor.u32 %v249, 2147483648
    %v254 = vxor.u32 %v250, 2147483648
    %v255 = vxor.u32 %v251, 2147483648
    %v256 = vmul.f32 %v253, 1.442695
    %v257 = vpow.pop %v256
    %v258 = vmul.f32 %v254, 1.442695
    %v259 = vpow.pop %v258
    %v260 = vmul.f32 %v255, 1.442695
    %v261 = vpow.pop %v260
    %v262 = vadd.f32 %v257, 1.0
    %v263 = vadd.f32 %v259, 1.0
    %v264 = vadd.f32 %v261, 1.0
    %v265 = vrcp.pop %v262
    %v266 = vmul.f32 %v262, %v265
    %v267 = vsub.f32 1.0, %v266
    %v268 = vmul.f32 %v265, %v267
    %v269 = vadd.f32 %v265, %v268
    %vm270 = vweird.f32 %v262
    %vm271 = vweird.f32 %v265
    %vm272 = vmor %vm270, %vm271
    %v273 = vsel %vm272, %v265, %v269
    %v274 = vand.u32 2147483647, %v262
    %vm275 = vcmp.eq.f32.partialorder %v274, 8.507059e+37
    %v276 = vand.u32 %v262, 2147483648
    %v277 = vor.u32 1.1754944e-38, %v276
    %v278 = vsel %vm275, %v277, %v273
    %v279 = vmul.f32 1.0, %v278
    %v280 = vrcp.pop %v263
    %v281 = vmul.f32 %v263, %v280
    %v282 = vsub.f32 1.0, %v281
    %v283 = vmul.f32 %v280, %v282
    %v284 = vadd.f32 %v280, %v283
    %vm285 = vweird.f32 %v263
    %vm286 = vweird.f32 %v280
    %vm287 = vmor %vm285, %vm286
    %v288 = vsel %vm287, %v280, %v284
    %v289 = vand.u32 2147483647, %v263
    %vm290 = vcmp.eq.f32.partialorder %v289, 8.507059e+37
    %v291 = vand.u32 %v263, 2147483648
    %v292 = vor.u32 1.1754944e-38, %v291
    %v293 = vsel %vm290, %v292, %v288
    %v294 = vmul.f32 1.0, %v293
    %v295 = vrcp.pop %v264
    %v296 = vmul.f32 %v264, %v295
    %v297 = vsub.f32 1.0, %v296
    %v298 = vmul.f32 %v295, %v297
    %v299 = vadd.f32 %v295, %v298
    %vm300 = vweird.f32 %v264
    %vm301 = vweird.f32 %v295
    %vm302 = vmor %vm300, %vm301
    %v303 = vsel %vm302, %v295, %v299
    %v304 = vand.u32 2147483647, %v264
    %vm305 = vcmp.eq.f32.partialorder %v304, 8.507059e+37
    %v306 = vand.u32 %v264, 2147483648
    %v307 = vor.u32 1.1754944e-38, %v306
    %v308 = vsel %vm305, %v307, %v303
    %v309 = vmul.f32 1.0, %v308
    %v310 = vtanh.pop %v252
    %v311 = vmul.f32 %v294, %v163
    %v312 = vmul.f32 %v279, %v310
    %v313 = vadd.f32 %v311, %v312
    %v314 = vtanh.pop %v313
    %v315 = vmul.f32 %v309, %v314
    %s316 = scalar_lea.vmem [#allocation12], 56
    %317 = vst [vmem:[%s316] sm:$0xff] %v315
    %s318 = scalar_lea.vmem [#allocation4], 192
    %v319 = vld [vmem:[%s318] sm:$0xff]
    %v320 = vld [vmem:[%s318 + $0x8] sm:$0xff]
    %v321 = vld [vmem:[%s318 + $0x10] sm:$0xff]
    %v322 = vld [vmem:[%s318 + $0x18] sm:$0xff]
    %323 = vmatpush.msra.mxu0 %v158
    %324 = vmatpush.msra.mxu0 %v154
    %325 = vmatpush.msra.mxu0 %v150
    %326 = vmatpush.msra.mxu0 %v146
    %327 = vmatpush.msra.mxu0 %v142
    %328 = vmatpush.msra.mxu0 %v138
    %329 = vmatpush.msra.mxu0 %v134
    %330 = vmatpush.msra.mxu0 %v130
    %331 = vmatpush.msra.mxu0 %v126
    %332 = vmatpush.msra.mxu0 %v122
    %333 = vmatpush.msra.mxu0 %v118
    %334 = vmatpush.msra.mxu0 %v114
    %335 = vmatpush.msra.mxu0 %v110
    %336 = vmatpush.msra.mxu0 %v106
    %337 = vmatpush.msra.mxu0 %v102
    %338 = vmatpush.msra.mxu0 %v98
    %339 = vmatmul.f32.gmra.mxu0 %v315
    %v340 = vpop.f32.mrf.mxu0
    %v341 = vadd.f32 0.0, %v340
    %342 = vdwg.mxu0
    %343 = vmatpush.msra.mxu0 %v159
    %344 = vmatpush.msra.mxu0 %v155
    %345 = vmatpush.msra.mxu0 %v151
    %346 = vmatpush.msra.mxu0 %v147
    %347 = vmatpush.msra.mxu0 %v143
    %348 = vmatpush.msra.mxu0 %v139
    %349 = vmatpush.msra.mxu0 %v135
    %350 = vmatpush.msra.mxu0 %v131
    %351 = vmatpush.msra.mxu0 %v127
    %352 = vmatpush.msra.mxu0 %v123
    %353 = vmatpush.msra.mxu0 %v119
    %354 = vmatpush.msra.mxu0 %v115
    %355 = vmatpush.msra.mxu0 %v111
    %356 = vmatpush.msra.mxu0 %v107
    %357 = vmatpush.msra.mxu0 %v103
    %358 = vmatpush.msra.mxu0 %v99
    %359 = vmatmul.f32.gmra.mxu0 %v315
    %v360 = vpop.f32.mrf.mxu0
    %v361 = vadd.f32 0.0, %v360
    %362 = vdwg.mxu0
    %363 = vmatpush.msra.mxu0 %v160
    %364 = vmatpush.msra.mxu0 %v156
    %365 = vmatpush.msra.mxu0 %v152
    %366 = vmatpush.msra.mxu0 %v148
    %367 = vmatpush.msra.mxu0 %v144
    %368 = vmatpush.msra.mxu0 %v140
    %369 = vmatpush.msra.mxu0 %v136
    %370 = vmatpush.msra.mxu0 %v132
    %371 = vmatpush.msra.mxu0 %v128
    %372 = vmatpush.msra.mxu0 %v124
    %373 = vmatpush.msra.mxu0 %v120
    %374 = vmatpush.msra.mxu0 %v116
    %375 = vmatpush.msra.mxu0 %v112
    %376 = vmatpush.msra.mxu0 %v108
    %377 = vmatpush.msra.mxu0 %v104
    %378 = vmatpush.msra.mxu0 %v100
    %379 = vmatmul.f32.gmra.mxu0 %v315
    %v380 = vpop.f32.mrf.mxu0
    %v381 = vadd.f32 0.0, %v380
    %382 = vdwg.mxu0
    %383 = vmatpush.msra.mxu0 %v161
    %384 = vmatpush.msra.mxu0 %v157
    %385 = vmatpush.msra.mxu0 %v153
    %386 = vmatpush.msra.mxu0 %v149
    %387 = vmatpush.msra.mxu0 %v145
    %388 = vmatpush.msra.mxu0 %v141
    %389 = vmatpush.msra.mxu0 %v137
    %390 = vmatpush.msra.mxu0 %v133
    %391 = vmatpush.msra.mxu0 %v129
    %392 = vmatpush.msra.mxu0 %v125
    %393 = vmatpush.msra.mxu0 %v121
    %394 = vmatpush.msra.mxu0 %v117
    %395 = vmatpush.msra.mxu0 %v113
    %396 = vmatpush.msra.mxu0 %v109
    %397 = vmatpush.msra.mxu0 %v105
    %398 = vmatpush.msra.mxu0 %v101
    %399 = vmatmul.f32.gmra.mxu0 %v315
    %v400 = vpop.f32.mrf.mxu0
    %v401 = vadd.f32 0.0, %v400
    %402 = vdwg.mxu0
    %v403 = vadd.f32 %v319, %v341
    %v404 = vadd.f32 %v320, %v361
    %v405 = vadd.f32 %v321, %v381
    %v406 = vadd.f32 %v322, %v401
    %v407 = vxor.u32 %v403, 2147483648
    %v408 = vxor.u32 %v404, 2147483648
    %v409 = vxor.u32 %v405, 2147483648
    %v410 = vmul.f32 %v407, 1.442695
    %v411 = vpow.pop %v410
    %v412 = vmul.f32 %v408, 1.442695
    %v413 = vpow.pop %v412
    %v414 = vmul.f32 %v409, 1.442695
    %v415 = vpow.pop %v414
    %v416 = vadd.f32 %v411, 1.0
    %v417 = vadd.f32 %v413, 1.0
    %v418 = vadd.f32 %v415, 1.0
    %v419 = vrcp.pop %v416
    %v420 = vmul.f32 %v416, %v419
    %v421 = vsub.f32 1.0, %v420
    %v422 = vmul.f32 %v419, %v421
    %v423 = vadd.f32 %v419, %v422
    %vm424 = vweird.f32 %v416
    %vm425 = vweird.f32 %v419
    %vm426 = vmor %vm424, %vm425
    %v427 = vsel %vm426, %v419, %v423
    %v428 = vand.u32 2147483647, %v416
    %vm429 = vcmp.eq.f32.partialorder %v428, 8.507059e+37
    %v430 = vand.u32 %v416, 2147483648
    %v431 = vor.u32 1.1754944e-38, %v430
    %v432 = vsel %vm429, %v431, %v427
    %v433 = vmul.f32 1.0, %v432
    %v434 = vrcp.pop %v417
    %v435 = vmul.f32 %v417, %v434
    %v436 = vsub.f32 1.0, %v435
    %v437 = vmul.f32 %v434, %v436
    %v438 = vadd.f32 %v434, %v437
    %vm439 = vweird.f32 %v417
    %vm440 = vweird.f32 %v434
    %vm441 = vmor %vm439, %vm440
    %v442 = vsel %vm441, %v434, %v438
    %v443 = vand.u32 2147483647, %v417
    %vm444 = vcmp.eq.f32.partialorder %v443, 8.507059e+37
    %v445 = vand.u32 %v417, 2147483648
    %v446 = vor.u32 1.1754944e-38, %v445
    %v447 = vsel %vm444, %v446, %v442
    %v448 = vmul.f32 1.0, %v447
    %v449 = vrcp.pop %v418
    %v450 = vmul.f32 %v418, %v449
    %v451 = vsub.f32 1.0, %v450
    %v452 = vmul.f32 %v449, %v451
    %v453 = vadd.f32 %v449, %v452
    %vm454 = vweird.f32 %v418
    %vm455 = vweird.f32 %v449
    %vm456 = vmor %vm454, %vm455
    %v457 = vsel %vm456, %v449, %v453
    %v458 = vand.u32 2147483647, %v418
    %vm459 = vcmp.eq.f32.partialorder %v458, 8.507059e+37
    %v460 = vand.u32 %v418, 2147483648
    %v461 = vor.u32 1.1754944e-38, %v460
    %v462 = vsel %vm459, %v461, %v457
    %v463 = vmul.f32 1.0, %v462
    %v464 = vtanh.pop %v406
    %v465 = vmul.f32 %v448, %v313
    %v466 = vmul.f32 %v433, %v464
    %v467 = vadd.f32 %v465, %v466
    %v468 = vtanh.pop %v467
    %v469 = vmul.f32 %v463, %v468
    %s470 = scalar_lea.vmem [#allocation12], 48
    %471 = vst [vmem:[%s470] sm:$0xff] %v469
    %s472 = scalar_lea.vmem [#allocation4], 160
    %v473 = vld [vmem:[%s472] sm:$0xff]
    %v474 = vld [vmem:[%s472 + $0x8] sm:$0xff]
    %v475 = vld [vmem:[%s472 + $0x10] sm:$0xff]
    %v476 = vld [vmem:[%s472 + $0x18] sm:$0xff]
    %477 = vmatpush.msra.mxu0 %v158
    %478 = vmatpush.msra.mxu0 %v154
    %479 = vmatpush.msra.mxu0 %v150
    %480 = vmatpush.msra.mxu0 %v146
    %481 = vmatpush.msra.mxu0 %v142
    %482 = vmatpush.msra.mxu0 %v138
    %483 = vmatpush.msra.mxu0 %v134
    %484 = vmatpush.msra.mxu0 %v130
    %485 = vmatpush.msra.mxu0 %v126
    %486 = vmatpush.msra.mxu0 %v122
    %487 = vmatpush.msra.mxu0 %v118
    %488 = vmatpush.msra.mxu0 %v114
    %489 = vmatpush.msra.mxu0 %v110
    %490 = vmatpush.msra.mxu0 %v106
    %491 = vmatpush.msra.mxu0 %v102
    %492 = vmatpush.msra.mxu0 %v98
    %493 = vmatmul.f32.gmra.mxu0 %v469
    %v494 = vpop.f32.mrf.mxu0
    %v495 = vadd.f32 0.0, %v494
    %496 = vdwg.mxu0
    %497 = vmatpush.msra.mxu0 %v159
    %498 = vmatpush.msra.mxu0 %v155
    %499 = vmatpush.msra.mxu0 %v151
    %500 = vmatpush.msra.mxu0 %v147
    %501 = vmatpush.msra.mxu0 %v143
    %502 = vmatpush.msra.mxu0 %v139
    %503 = vmatpush.msra.mxu0 %v135
    %504 = vmatpush.msra.mxu0 %v131
    %505 = vmatpush.msra.mxu0 %v127
    %506 = vmatpush.msra.mxu0 %v123
    %507 = vmatpush.msra.mxu0 %v119
    %508 = vmatpush.msra.mxu0 %v115
    %509 = vmatpush.msra.mxu0 %v111
    %510 = vmatpush.msra.mxu0 %v107
    %511 = vmatpush.msra.mxu0 %v103
    %512 = vmatpush.msra.mxu0 %v99
    %513 = vmatmul.f32.gmra.mxu0 %v469
    %v514 = vpop.f32.mrf.mxu0
    %v515 = vadd.f32 0.0, %v514
    %516 = vdwg.mxu0
    %517 = vmatpush.msra.mxu0 %v160
    %518 = vmatpush.msra.mxu0 %v156
    %519 = vmatpush.msra.mxu0 %v152
    %520 = vmatpush.msra.mxu0 %v148
    %521 = vmatpush.msra.mxu0 %v144
    %522 = vmatpush.msra.mxu0 %v140
    %523 = vmatpush.msra.mxu0 %v136
    %524 = vmatpush.msra.mxu0 %v132
    %525 = vmatpush.msra.mxu0 %v128
    %526 = vmatpush.msra.mxu0 %v124
    %527 = vmatpush.msra.mxu0 %v120
    %528 = vmatpush.msra.mxu0 %v116
    %529 = vmatpush.msra.mxu0 %v112
    %530 = vmatpush.msra.mxu0 %v108
    %531 = vmatpush.msra.mxu0 %v104
    %532 = vmatpush.msra.mxu0 %v100
    %533 = vmatmul.f32.gmra.mxu0 %v469
    %v534 = vpop.f32.mrf.mxu0
    %v535 = vadd.f32 0.0, %v534
    %536 = vdwg.mxu0
    %537 = vmatpush.msra.mxu0 %v161
    %538 = vmatpush.msra.mxu0 %v157
    %539 = vmatpush.msra.mxu0 %v153
    %540 = vmatpush.msra.mxu0 %v149
    %541 = vmatpush.msra.mxu0 %v145
    %542 = vmatpush.msra.mxu0 %v141
    %543 = vmatpush.msra.mxu0 %v137
    %544 = vmatpush.msra.mxu0 %v133
    %545 = vmatpush.msra.mxu0 %v129
    %546 = vmatpush.msra.mxu0 %v125
    %547 = vmatpush.msra.mxu0 %v121
    %548 = vmatpush.msra.mxu0 %v117
    %549 = vmatpush.msra.mxu0 %v113
    %550 = vmatpush.msra.mxu0 %v109
    %551 = vmatpush.msra.mxu0 %v105
    %552 = vmatpush.msra.mxu0 %v101
    %553 = vmatmul.f32.gmra.mxu0 %v469
    %v554 = vpop.f32.mrf.mxu0
    %v555 = vadd.f32 0.0, %v554
    %556 = vdwg.mxu0
    %v557 = vadd.f32 %v473, %v495
    %v558 = vadd.f32 %v474, %v515
    %v559 = vadd.f32 %v475, %v535
    %v560 = vadd.f32 %v476, %v555
    %v561 = vxor.u32 %v557, 2147483648
    %v562 = vxor.u32 %v558, 2147483648
    %v563 = vxor.u32 %v559, 2147483648
    %v564 = vmul.f32 %v561, 1.442695
    %v565 = vpow.pop %v564
    %v566 = vmul.f32 %v562, 1.442695
    %v567 = vpow.pop %v566
    %v568 = vmul.f32 %v563, 1.442695
    %v569 = vpow.pop %v568
    %v570 = vadd.f32 %v565, 1.0
    %v571 = vadd.f32 %v567, 1.0
    %v572 = vadd.f32 %v569, 1.0
    %v573 = vrcp.pop %v570
    %v574 = vmul.f32 %v570, %v573
    %v575 = vsub.f32 1.0, %v574
    %v576 = vmul.f32 %v573, %v575
    %v577 = vadd.f32 %v573, %v576
    %vm578 = vweird.f32 %v570
    %vm579 = vweird.f32 %v573
    %vm580 = vmor %vm578, %vm579
    %v581 = vsel %vm580, %v573, %v577
    %v582 = vand.u32 2147483647, %v570
    %vm583 = vcmp.eq.f32.partialorder %v582, 8.507059e+37
    %v584 = vand.u32 %v570, 2147483648
    %v585 = vor.u32 1.1754944e-38, %v584
    %v586 = vsel %vm583, %v585, %v581
    %v587 = vmul.f32 1.0, %v586
    %v588 = vrcp.pop %v571
    %v589 = vmul.f32 %v571, %v588
    %v590 = vsub.f32 1.0, %v589
    %v591 = vmul.f32 %v588, %v590
    %v592 = vadd.f32 %v588, %v591
    %vm593 = vweird.f32 %v571
    %vm594 = vweird.f32 %v588
    %vm595 = vmor %vm593, %vm594
    %v596 = vsel %vm595, %v588, %v592
    %v597 = vand.u32 2147483647, %v571
    %vm598 = vcmp.eq.f32.partialorder %v597, 8.507059e+37
    %v599 = vand.u32 %v571, 2147483648
    %v600 = vor.u32 1.1754944e-38, %v599
    %v601 = vsel %vm598, %v600, %v596
    %v602 = vmul.f32 1.0, %v601
    %v603 = vrcp.pop %v572
    %v604 = vmul.f32 %v572, %v603
    %v605 = vsub.f32 1.0, %v604
    %v606 = vmul.f32 %v603, %v605
    %v607 = vadd.f32 %v603, %v606
    %vm608 = vweird.f32 %v572
    %vm609 = vweird.f32 %v603
    %vm610 = vmor %vm608, %vm609
    %v611 = vsel %vm610, %v603, %v607
    %v612 = vand.u32 2147483647, %v572
    %vm613 = vcmp.eq.f32.partialorder %v612, 8.507059e+37
    %v614 = vand.u32 %v572, 2147483648
    %v615 = vor.u32 1.1754944e-38, %v614
    %v616 = vsel %vm613, %v615, %v611
    %v617 = vmul.f32 1.0, %v616
    %v618 = vtanh.pop %v560
    %v619 = vmul.f32 %v602, %v467
    %v620 = vmul.f32 %v587, %v618
    %v621 = vadd.f32 %v619, %v620
    %v622 = vtanh.pop %v621
    %v623 = vmul.f32 %v617, %v622
    %s624 = scalar_lea.vmem [#allocation12], 40
    %625 = vst [vmem:[%s624] sm:$0xff] %v623
    %s626 = scalar_lea.vmem [#allocation4], 128
    %v627 = vld [vmem:[%s626] sm:$0xff]
    %v628 = vld [vmem:[%s626 + $0x8] sm:$0xff]
    %v629 = vld [vmem:[%s626 + $0x10] sm:$0xff]
    %v630 = vld [vmem:[%s626 + $0x18] sm:$0xff]
    %631 = vmatpush.msra.mxu0 %v158
    %632 = vmatpush.msra.mxu0 %v154
    %633 = vmatpush.msra.mxu0 %v150
    %634 = vmatpush.msra.mxu0 %v146
    %635 = vmatpush.msra.mxu0 %v142
    %636 = vmatpush.msra.mxu0 %v138
    %637 = vmatpush.msra.mxu0 %v134
    %638 = vmatpush.msra.mxu0 %v130
    %639 = vmatpush.msra.mxu0 %v126
    %640 = vmatpush.msra.mxu0 %v122
    %641 = vmatpush.msra.mxu0 %v118
    %642 = vmatpush.msra.mxu0 %v114
    %643 = vmatpush.msra.mxu0 %v110
    %644 = vmatpush.msra.mxu0 %v106
    %645 = vmatpush.msra.mxu0 %v102
    %646 = vmatpush.msra.mxu0 %v98
    %647 = vmatmul.f32.gmra.mxu0 %v623
    %v648 = vpop.f32.mrf.mxu0
    %v649 = vadd.f32 0.0, %v648
    %650 = vdwg.mxu0
    %651 = vmatpush.msra.mxu0 %v159
    %652 = vmatpush.msra.mxu0 %v155
    %653 = vmatpush.msra.mxu0 %v151
    %654 = vmatpush.msra.mxu0 %v147
    %655 = vmatpush.msra.mxu0 %v143
    %656 = vmatpush.msra.mxu0 %v139
    %657 = vmatpush.msra.mxu0 %v135
    %658 = vmatpush.msra.mxu0 %v131
    %659 = vmatpush.msra.mxu0 %v127
    %660 = vmatpush.msra.mxu0 %v123
    %661 = vmatpush.msra.mxu0 %v119
    %662 = vmatpush.msra.mxu0 %v115
    %663 = vmatpush.msra.mxu0 %v111
    %664 = vmatpush.msra.mxu0 %v107
    %665 = vmatpush.msra.mxu0 %v103
    %666 = vmatpush.msra.mxu0 %v99
    %667 = vmatmul.f32.gmra.mxu0 %v623
    %v668 = vpop.f32.mrf.mxu0
    %v669 = vadd.f32 0.0, %v668
    %670 = vdwg.mxu0
    %671 = vmatpush.msra.mxu0 %v160
    %672 = vmatpush.msra.mxu0 %v156
    %673 = vmatpush.msra.mxu0 %v152
    %674 = vmatpush.msra.mxu0 %v148
    %675 = vmatpush.msra.mxu0 %v144
    %676 = vmatpush.msra.mxu0 %v140
    %677 = vmatpush.msra.mxu0 %v136
    %678 = vmatpush.msra.mxu0 %v132
    %679 = vmatpush.msra.mxu0 %v128
    %680 = vmatpush.msra.mxu0 %v124
    %681 = vmatpush.msra.mxu0 %v120
    %682 = vmatpush.msra.mxu0 %v116
    %683 = vmatpush.msra.mxu0 %v112
    %684 = vmatpush.msra.mxu0 %v108
    %685 = vmatpush.msra.mxu0 %v104
    %686 = vmatpush.msra.mxu0 %v100
    %687 = vmatmul.f32.gmra.mxu0 %v623
    %v688 = vpop.f32.mrf.mxu0
    %v689 = vadd.f32 0.0, %v688
    %690 = vdwg.mxu0
    %691 = vmatpush.msra.mxu0 %v161
    %692 = vmatpush.msra.mxu0 %v157
    %693 = vmatpush.msra.mxu0 %v153
    %694 = vmatpush.msra.mxu0 %v149
    %695 = vmatpush.msra.mxu0 %v145
    %696 = vmatpush.msra.mxu0 %v141
    %697 = vmatpush.msra.mxu0 %v137
    %698 = vmatpush.msra.mxu0 %v133
    %699 = vmatpush.msra.mxu0 %v129
    %700 = vmatpush.msra.mxu0 %v125
    %701 = vmatpush.msra.mxu0 %v121
    %702 = vmatpush.msra.mxu0 %v117
    %703 = vmatpush.msra.mxu0 %v113
    %704 = vmatpush.msra.mxu0 %v109
    %705 = vmatpush.msra.mxu0 %v105
    %706 = vmatpush.msra.mxu0 %v101
    %707 = vmatmul.f32.gmra.mxu0 %v623
    %v708 = vpop.f32.mrf.mxu0
    %v709 = vadd.f32 0.0, %v708
    %710 = vdwg.mxu0
    %v711 = vadd.f32 %v627, %v649
    %v712 = vadd.f32 %v628, %v669
    %v713 = vadd.f32 %v629, %v689
    %v714 = vadd.f32 %v630, %v709
    %v715 = vxor.u32 %v711, 2147483648
    %v716 = vxor.u32 %v712, 2147483648
    %v717 = vxor.u32 %v713, 2147483648
    %v718 = vmul.f32 %v715, 1.442695
    %v719 = vpow.pop %v718
    %v720 = vmul.f32 %v716, 1.442695
    %v721 = vpow.pop %v720
    %v722 = vmul.f32 %v717, 1.442695
    %v723 = vpow.pop %v722
    %v724 = vadd.f32 %v719, 1.0
    %v725 = vadd.f32 %v721, 1.0
    %v726 = vadd.f32 %v723, 1.0
    %v727 = vrcp.pop %v724
    %v728 = vmul.f32 %v724, %v727
    %v729 = vsub.f32 1.0, %v728
    %v730 = vmul.f32 %v727, %v729
    %v731 = vadd.f32 %v727, %v730
    %vm732 = vweird.f32 %v724
    %vm733 = vweird.f32 %v727
    %vm734 = vmor %vm732, %vm733
    %v735 = vsel %vm734, %v727, %v731
    %v736 = vand.u32 2147483647, %v724
    %vm737 = vcmp.eq.f32.partialorder %v736, 8.507059e+37
    %v738 = vand.u32 %v724, 2147483648
    %v739 = vor.u32 1.1754944e-38, %v738
    %v740 = vsel %vm737, %v739, %v735
    %v741 = vmul.f32 1.0, %v740
    %v742 = vrcp.pop %v725
    %v743 = vmul.f32 %v725, %v742
    %v744 = vsub.f32 1.0, %v743
    %v745 = vmul.f32 %v742, %v744
    %v746 = vadd.f32 %v742, %v745
    %vm747 = vweird.f32 %v725
    %vm748 = vweird.f32 %v742
    %vm749 = vmor %vm747, %vm748
    %v750 = vsel %vm749, %v742, %v746
    %v751 = vand.u32 2147483647, %v725
    %vm752 = vcmp.eq.f32.partialorder %v751, 8.507059e+37
    %v753 = vand.u32 %v725, 2147483648
    %v754 = vor.u32 1.1754944e-38, %v753
    %v755 = vsel %vm752, %v754, %v750
    %v756 = vmul.f32 1.0, %v755
    %v757 = vrcp.pop %v726
    %v758 = vmul.f32 %v726, %v757
    %v759 = vsub.f32 1.0, %v758
    %v760 = vmul.f32 %v757, %v759
    %v761 = vadd.f32 %v757, %v760
    %vm762 = vweird.f32 %v726
    %vm763 = vweird.f32 %v757
    %vm764 = vmor %vm762, %vm763
    %v765 = vsel %vm764, %v757, %v761
    %v766 = vand.u32 2147483647, %v726
    %vm767 = vcmp.eq.f32.partialorder %v766, 8.507059e+37
    %v768 = vand.u32 %v726, 2147483648
    %v769 = vor.u32 1.1754944e-38, %v768
    %v770 = vsel %vm767, %v769, %v765
    %v771 = vmul.f32 1.0, %v770
    %v772 = vtanh.pop %v714
    %v773 = vmul.f32 %v756, %v621
    %v774 = vmul.f32 %v741, %v772
    %v775 = vadd.f32 %v773, %v774
    %v776 = vtanh.pop %v775
    %v777 = vmul.f32 %v771, %v776
    %s778 = scalar_lea.vmem [#allocation12], 32
    %779 = vst [vmem:[%s778] sm:$0xff] %v777
    %s780 = scalar_lea.vmem [#allocation4], 96
    %v781 = vld [vmem:[%s780] sm:$0xff]
    %v782 = vld [vmem:[%s780 + $0x8] sm:$0xff]
    %v783 = vld [vmem:[%s780 + $0x10] sm:$0xff]
    %v784 = vld [vmem:[%s780 + $0x18] sm:$0xff]
    %785 = vmatpush.msra.mxu0 %v158
    %786 = vmatpush.msra.mxu0 %v154
    %787 = vmatpush.msra.mxu0 %v150
    %788 = vmatpush.msra.mxu0 %v146
    %789 = vmatpush.msra.mxu0 %v142
    %790 = vmatpush.msra.mxu0 %v138
    %791 = vmatpush.msra.mxu0 %v134
    %792 = vmatpush.msra.mxu0 %v130
    %793 = vmatpush.msra.mxu0 %v126
    %794 = vmatpush.msra.mxu0 %v122
    %795 = vmatpush.msra.mxu0 %v118
    %796 = vmatpush.msra.mxu0 %v114
    %797 = vmatpush.msra.mxu0 %v110
    %798 = vmatpush.msra.mxu0 %v106
    %799 = vmatpush.msra.mxu0 %v102
    %800 = vmatpush.msra.mxu0 %v98
    %801 = vmatmul.f32.gmra.mxu0 %v777
    %v802 = vpop.f32.mrf.mxu0
    %v803 = vadd.f32 0.0, %v802
    %804 = vdwg.mxu0
    %805 = vmatpush.msra.mxu0 %v159
    %806 = vmatpush.msra.mxu0 %v155
    %807 = vmatpush.msra.mxu0 %v151
    %808 = vmatpush.msra.mxu0 %v147
    %809 = vmatpush.msra.mxu0 %v143
    %810 = vmatpush.msra.mxu0 %v139
    %811 = vmatpush.msra.mxu0 %v135
    %812 = vmatpush.msra.mxu0 %v131
    %813 = vmatpush.msra.mxu0 %v127
    %814 = vmatpush.msra.mxu0 %v123
    %815 = vmatpush.msra.mxu0 %v119
    %816 = vmatpush.msra.mxu0 %v115
    %817 = vmatpush.msra.mxu0 %v111
    %818 = vmatpush.msra.mxu0 %v107
    %819 = vmatpush.msra.mxu0 %v103
    %820 = vmatpush.msra.mxu0 %v99
    %821 = vmatmul.f32.gmra.mxu0 %v777
    %v822 = vpop.f32.mrf.mxu0
    %v823 = vadd.f32 0.0, %v822
    %824 = vdwg.mxu0
    %825 = vmatpush.msra.mxu0 %v160
    %826 = vmatpush.msra.mxu0 %v156
    %827 = vmatpush.msra.mxu0 %v152
    %828 = vmatpush.msra.mxu0 %v148
    %829 = vmatpush.msra.mxu0 %v144
    %830 = vmatpush.msra.mxu0 %v140
    %831 = vmatpush.msra.mxu0 %v136
    %832 = vmatpush.msra.mxu0 %v132
    %833 = vmatpush.msra.mxu0 %v128
    %834 = vmatpush.msra.mxu0 %v124
    %835 = vmatpush.msra.mxu0 %v120
    %836 = vmatpush.msra.mxu0 %v116
    %837 = vmatpush.msra.mxu0 %v112
    %838 = vmatpush.msra.mxu0 %v108
    %839 = vmatpush.msra.mxu0 %v104
    %840 = vmatpush.msra.mxu0 %v100
    %841 = vmatmul.f32.gmra.mxu0 %v777
    %v842 = vpop.f32.mrf.mxu0
    %v843 = vadd.f32 0.0, %v842
    %844 = vdwg.mxu0
    %845 = vmatpush.msra.mxu0 %v161
    %846 = vmatpush.msra.mxu0 %v157
    %847 = vmatpush.msra.mxu0 %v153
    %848 = vmatpush.msra.mxu0 %v149
    %849 = vmatpush.msra.mxu0 %v145
    %850 = vmatpush.msra.mxu0 %v141
    %851 = vmatpush.msra.mxu0 %v137
    %852 = vmatpush.msra.mxu0 %v133
    %853 = vmatpush.msra.mxu0 %v129
    %854 = vmatpush.msra.mxu0 %v125
    %855 = vmatpush.msra.mxu0 %v121
    %856 = vmatpush.msra.mxu0 %v117
    %857 = vmatpush.msra.mxu0 %v113
    %858 = vmatpush.msra.mxu0 %v109
    %859 = vmatpush.msra.mxu0 %v105
    %860 = vmatpush.msra.mxu0 %v101
    %861 = vmatmul.f32.gmra.mxu0 %v777
    %v862 = vpop.f32.mrf.mxu0
    %v863 = vadd.f32 0.0, %v862
    %864 = vdwg.mxu0
    %v865 = vadd.f32 %v781, %v803
    %v866 = vadd.f32 %v782, %v823
    %v867 = vadd.f32 %v783, %v843
    %v868 = vadd.f32 %v784, %v863
    %v869 = vxor.u32 %v865, 2147483648
    %v870 = vxor.u32 %v866, 2147483648
    %v871 = vxor.u32 %v867, 2147483648
    %v872 = vmul.f32 %v869, 1.442695
    %v873 = vpow.pop %v872
    %v874 = vmul.f32 %v870, 1.442695
    %v875 = vpow.pop %v874
    %v876 = vmul.f32 %v871, 1.442695
    %v877 = vpow.pop %v876
    %v878 = vadd.f32 %v873, 1.0
    %v879 = vadd.f32 %v875, 1.0
    %v880 = vadd.f32 %v877, 1.0
    %v881 = vrcp.pop %v878
    %v882 = vmul.f32 %v878, %v881
    %v883 = vsub.f32 1.0, %v882
    %v884 = vmul.f32 %v881, %v883
    %v885 = vadd.f32 %v881, %v884
    %vm886 = vweird.f32 %v878
    %vm887 = vweird.f32 %v881
    %vm888 = vmor %vm886, %vm887
    %v889 = vsel %vm888, %v881, %v885
    %v890 = vand.u32 2147483647, %v878
    %vm891 = vcmp.eq.f32.partialorder %v890, 8.507059e+37
    %v892 = vand.u32 %v878, 2147483648
    %v893 = vor.u32 1.1754944e-38, %v892
    %v894 = vsel %vm891, %v893, %v889
    %v895 = vmul.f32 1.0, %v894
    %v896 = vrcp.pop %v879
    %v897 = vmul.f32 %v879, %v896
    %v898 = vsub.f32 1.0, %v897
    %v899 = vmul.f32 %v896, %v898
    %v900 = vadd.f32 %v896, %v899
    %vm901 = vweird.f32 %v879
    %vm902 = vweird.f32 %v896
    %vm903 = vmor %vm901, %vm902
    %v904 = vsel %vm903, %v896, %v900
    %v905 = vand.u32 2147483647, %v879
    %vm906 = vcmp.eq.f32.partialorder %v905, 8.507059e+37
    %v907 = vand.u32 %v879, 2147483648
    %v908 = vor.u32 1.1754944e-38, %v907
    %v909 = vsel %vm906, %v908, %v904
    %v910 = vmul.f32 1.0, %v909
    %v911 = vrcp.pop %v880
    %v912 = vmul.f32 %v880, %v911
    %v913 = vsub.f32 1.0, %v912
    %v914 = vmul.f32 %v911, %v913
    %v915 = vadd.f32 %v911, %v914
    %vm916 = vweird.f32 %v880
    %vm917 = vweird.f32 %v911
    %vm918 = vmor %vm916, %vm917
    %v919 = vsel %vm918, %v911, %v915
    %v920 = vand.u32 2147483647, %v880
    %vm921 = vcmp.eq.f32.partialorder %v920, 8.507059e+37
    %v922 = vand.u32 %v880, 2147483648
    %v923 = vor.u32 1.1754944e-38, %v922
    %v924 = vsel %vm921, %v923, %v919
    %v925 = vmul.f32 1.0, %v924
    %v926 = vtanh.pop %v868
    %v927 = vmul.f32 %v910, %v775
    %v928 = vmul.f32 %v895, %v926
    %v929 = vadd.f32 %v927, %v928
    %v930 = vtanh.pop %v929
    %v931 = vmul.f32 %v925, %v930
    %s932 = scalar_lea.vmem [#allocation12], 24
    %933 = vst [vmem:[%s932] sm:$0xff] %v931
    %s934 = scalar_lea.vmem [#allocation4], 64
    %v935 = vld [vmem:[%s934] sm:$0xff]
    %v936 = vld [vmem:[%s934 + $0x8] sm:$0xff]
    %v937 = vld [vmem:[%s934 + $0x10] sm:$0xff]
    %v938 = vld [vmem:[%s934 + $0x18] sm:$0xff]
    %939 = vmatpush.msra.mxu0 %v158
    %940 = vmatpush.msra.mxu0 %v154
    %941 = vmatpush.msra.mxu0 %v150
    %942 = vmatpush.msra.mxu0 %v146
    %943 = vmatpush.msra.mxu0 %v142
    %944 = vmatpush.msra.mxu0 %v138
    %945 = vmatpush.msra.mxu0 %v134
    %946 = vmatpush.msra.mxu0 %v130
    %947 = vmatpush.msra.mxu0 %v126
    %948 = vmatpush.msra.mxu0 %v122
    %949 = vmatpush.msra.mxu0 %v118
    %950 = vmatpush.msra.mxu0 %v114
    %951 = vmatpush.msra.mxu0 %v110
    %952 = vmatpush.msra.mxu0 %v106
    %953 = vmatpush.msra.mxu0 %v102
    %954 = vmatpush.msra.mxu0 %v98
    %955 = vmatmul.f32.gmra.mxu0 %v931
    %v956 = vpop.f32.mrf.mxu0
    %v957 = vadd.f32 0.0, %v956
    %958 = vdwg.mxu0
    %959 = vmatpush.msra.mxu0 %v159
    %960 = vmatpush.msra.mxu0 %v155
    %961 = vmatpush.msra.mxu0 %v151
    %962 = vmatpush.msra.mxu0 %v147
    %963 = vmatpush.msra.mxu0 %v143
    %964 = vmatpush.msra.mxu0 %v139
    %965 = vmatpush.msra.mxu0 %v135
    %966 = vmatpush.msra.mxu0 %v131
    %967 = vmatpush.msra.mxu0 %v127
    %968 = vmatpush.msra.mxu0 %v123
    %969 = vmatpush.msra.mxu0 %v119
    %970 = vmatpush.msra.mxu0 %v115
    %971 = vmatpush.msra.mxu0 %v111
    %972 = vmatpush.msra.mxu0 %v107
    %973 = vmatpush.msra.mxu0 %v103
    %974 = vmatpush.msra.mxu0 %v99
    %975 = vmatmul.f32.gmra.mxu0 %v931
    %v976 = vpop.f32.mrf.mxu0
    %v977 = vadd.f32 0.0, %v976
    %978 = vdwg.mxu0
    %979 = vmatpush.msra.mxu0 %v160
    %980 = vmatpush.msra.mxu0 %v156
    %981 = vmatpush.msra.mxu0 %v152
    %982 = vmatpush.msra.mxu0 %v148
    %983 = vmatpush.msra.mxu0 %v144
    %984 = vmatpush.msra.mxu0 %v140
    %985 = vmatpush.msra.mxu0 %v136
    %986 = vmatpush.msra.mxu0 %v132
    %987 = vmatpush.msra.mxu0 %v128
    %988 = vmatpush.msra.mxu0 %v124
    %989 = vmatpush.msra.mxu0 %v120
    %990 = vmatpush.msra.mxu0 %v116
    %991 = vmatpush.msra.mxu0 %v112
    %992 = vmatpush.msra.mxu0 %v108
    %993 = vmatpush.msra.mxu0 %v104
    %994 = vmatpush.msra.mxu0 %v100
    %995 = vmatmul.f32.gmra.mxu0 %v931
    %v996 = vpop.f32.mrf.mxu0
    %v997 = vadd.f32 0.0, %v996
    %998 = vdwg.mxu0
    %999 = vmatpush.msra.mxu0 %v161
    %1000 = vmatpush.msra.mxu0 %v157
    %1001 = vmatpush.msra.mxu0 %v153
    %1002 = vmatpush.msra.mxu0 %v149
    %1003 = vmatpush.msra.mxu0 %v145
    %1004 = vmatpush.msra.mxu0 %v141
    %1005 = vmatpush.msra.mxu0 %v137
    %1006 = vmatpush.msra.mxu0 %v133
    %1007 = vmatpush.msra.mxu0 %v129
    %1008 = vmatpush.msra.mxu0 %v125
    %1009 = vmatpush.msra.mxu0 %v121
    %1010 = vmatpush.msra.mxu0 %v117
    %1011 = vmatpush.msra.mxu0 %v113
    %1012 = vmatpush.msra.mxu0 %v109
    %1013 = vmatpush.msra.mxu0 %v105
    %1014 = vmatpush.msra.mxu0 %v101
    %1015 = vmatmul.f32.gmra.mxu0 %v931
    %v1016 = vpop.f32.mrf.mxu0
    %v1017 = vadd.f32 0.0, %v1016
    %1018 = vdwg.mxu0
    %v1019 = vadd.f32 %v935, %v957
    %v1020 = vadd.f32 %v936, %v977
    %v1021 = vadd.f32 %v937, %v997
    %v1022 = vadd.f32 %v938, %v1017
    %v1023 = vxor.u32 %v1019, 2147483648
    %v1024 = vxor.u32 %v1020, 2147483648
    %v1025 = vxor.u32 %v1021, 2147483648
    %v1026 = vmul.f32 %v1023, 1.442695
    %v1027 = vpow.pop %v1026
    %v1028 = vmul.f32 %v1024, 1.442695
    %v1029 = vpow.pop %v1028
    %v1030 = vmul.f32 %v1025, 1.442695
    %v1031 = vpow.pop %v1030
    %v1032 = vadd.f32 %v1027, 1.0
    %v1033 = vadd.f32 %v1029, 1.0
    %v1034 = vadd.f32 %v1031, 1.0
    %v1035 = vrcp.pop %v1032
    %v1036 = vmul.f32 %v1032, %v1035
    %v1037 = vsub.f32 1.0, %v1036
    %v1038 = vmul.f32 %v1035, %v1037
    %v1039 = vadd.f32 %v1035, %v1038
    %vm1040 = vweird.f32 %v1032
    %vm1041 = vweird.f32 %v1035
    %vm1042 = vmor %vm1040, %vm1041
    %v1043 = vsel %vm1042, %v1035, %v1039
    %v1044 = vand.u32 2147483647, %v1032
    %vm1045 = vcmp.eq.f32.partialorder %v1044, 8.507059e+37
    %v1046 = vand.u32 %v1032, 2147483648
    %v1047 = vor.u32 1.1754944e-38, %v1046
    %v1048 = vsel %vm1045, %v1047, %v1043
    %v1049 = vmul.f32 1.0, %v1048
    %v1050 = vrcp.pop %v1033
    %v1051 = vmul.f32 %v1033, %v1050
    %v1052 = vsub.f32 1.0, %v1051
    %v1053 = vmul.f32 %v1050, %v1052
    %v1054 = vadd.f32 %v1050, %v1053
    %vm1055 = vweird.f32 %v1033
    %vm1056 = vweird.f32 %v1050
    %vm1057 = vmor %vm1055, %vm1056
    %v1058 = vsel %vm1057, %v1050, %v1054
    %v1059 = vand.u32 2147483647, %v1033
    %vm1060 = vcmp.eq.f32.partialorder %v1059, 8.507059e+37
    %v1061 = vand.u32 %v1033, 2147483648
    %v1062 = vor.u32 1.1754944e-38, %v1061
    %v1063 = vsel %vm1060, %v1062, %v1058
    %v1064 = vmul.f32 1.0, %v1063
    %v1065 = vrcp.pop %v1034
    %v1066 = vmul.f32 %v1034, %v1065
    %v1067 = vsub.f32 1.0, %v1066
    %v1068 = vmul.f32 %v1065, %v1067
    %v1069 = vadd.f32 %v1065, %v1068
    %vm1070 = vweird.f32 %v1034
    %vm1071 = vweird.f32 %v1065
    %vm1072 = vmor %vm1070, %vm1071
    %v1073 = vsel %vm1072, %v1065, %v1069
    %v1074 = vand.u32 2147483647, %v1034
    %vm1075 = vcmp.eq.f32.partialorder %v1074, 8.507059e+37
    %v1076 = vand.u32 %v1034, 2147483648
    %v1077 = vor.u32 1.1754944e-38, %v1076
    %v1078 = vsel %vm1075, %v1077, %v1073
    %v1079 = vmul.f32 1.0, %v1078
    %v1080 = vtanh.pop %v1022
    %v1081 = vmul.f32 %v1064, %v929
    %v1082 = vmul.f32 %v1049, %v1080
    %v1083 = vadd.f32 %v1081, %v1082
    %v1084 = vtanh.pop %v1083
    %v1085 = vmul.f32 %v1079, %v1084
    %s1086 = scalar_lea.vmem [#allocation12], 16
    %1087 = vst [vmem:[%s1086] sm:$0xff] %v1085
    %s1088 = scalar_lea.vmem [#allocation4], 32
    %v1089 = vld [vmem:[%s1088] sm:$0xff]
    %v1090 = vld [vmem:[%s1088 + $0x8] sm:$0xff]
    %v1091 = vld [vmem:[%s1088 + $0x10] sm:$0xff]
    %v1092 = vld [vmem:[%s1088 + $0x18] sm:$0xff]
    %1093 = vmatpush.msra.mxu0 %v158
    %1094 = vmatpush.msra.mxu0 %v154
    %1095 = vmatpush.msra.mxu0 %v150
    %1096 = vmatpush.msra.mxu0 %v146
    %1097 = vmatpush.msra.mxu0 %v142
    %1098 = vmatpush.msra.mxu0 %v138
    %1099 = vmatpush.msra.mxu0 %v134
    %1100 = vmatpush.msra.mxu0 %v130
    %1101 = vmatpush.msra.mxu0 %v126
    %1102 = vmatpush.msra.mxu0 %v122
    %1103 = vmatpush.msra.mxu0 %v118
    %1104 = vmatpush.msra.mxu0 %v114
    %1105 = vmatpush.msra.mxu0 %v110
    %1106 = vmatpush.msra.mxu0 %v106
    %1107 = vmatpush.msra.mxu0 %v102
    %1108 = vmatpush.msra.mxu0 %v98
    %1109 = vmatmul.f32.gmra.mxu0 %v1085
    %v1110 = vpop.f32.mrf.mxu0
    %v1111 = vadd.f32 0.0, %v1110
    %1112 = vdwg.mxu0
    %1113 = vmatpush.msra.mxu0 %v159
    %1114 = vmatpush.msra.mxu0 %v155
    %1115 = vmatpush.msra.mxu0 %v151
    %1116 = vmatpush.msra.mxu0 %v147
    %1117 = vmatpush.msra.mxu0 %v143
    %1118 = vmatpush.msra.mxu0 %v139
    %1119 = vmatpush.msra.mxu0 %v135
    %1120 = vmatpush.msra.mxu0 %v131
    %1121 = vmatpush.msra.mxu0 %v127
    %1122 = vmatpush.msra.mxu0 %v123
    %1123 = vmatpush.msra.mxu0 %v119
    %1124 = vmatpush.msra.mxu0 %v115
    %1125 = vmatpush.msra.mxu0 %v111
    %1126 = vmatpush.msra.mxu0 %v107
    %1127 = vmatpush.msra.mxu0 %v103
    %1128 = vmatpush.msra.mxu0 %v99
    %1129 = vmatmul.f32.gmra.mxu0 %v1085
    %v1130 = vpop.f32.mrf.mxu0
    %v1131 = vadd.f32 0.0, %v1130
    %1132 = vdwg.mxu0
    %1133 = vmatpush.msra.mxu0 %v160
    %1134 = vmatpush.msra.mxu0 %v156
    %1135 = vmatpush.msra.mxu0 %v152
    %1136 = vmatpush.msra.mxu0 %v148
    %1137 = vmatpush.msra.mxu0 %v144
    %1138 = vmatpush.msra.mxu0 %v140
    %1139 = vmatpush.msra.mxu0 %v136
    %1140 = vmatpush.msra.mxu0 %v132
    %1141 = vmatpush.msra.mxu0 %v128
    %1142 = vmatpush.msra.mxu0 %v124
    %1143 = vmatpush.msra.mxu0 %v120
    %1144 = vmatpush.msra.mxu0 %v116
    %1145 = vmatpush.msra.mxu0 %v112
    %1146 = vmatpush.msra.mxu0 %v108
    %1147 = vmatpush.msra.mxu0 %v104
    %1148 = vmatpush.msra.mxu0 %v100
    %1149 = vmatmul.f32.gmra.mxu0 %v1085
    %v1150 = vpop.f32.mrf.mxu0
    %v1151 = vadd.f32 0.0, %v1150
    %1152 = vdwg.mxu0
    %1153 = vmatpush.msra.mxu0 %v161
    %1154 = vmatpush.msra.mxu0 %v157
    %1155 = vmatpush.msra.mxu0 %v153
    %1156 = vmatpush.msra.mxu0 %v149
    %1157 = vmatpush.msra.mxu0 %v145
    %1158 = vmatpush.msra.mxu0 %v141
    %1159 = vmatpush.msra.mxu0 %v137
    %1160 = vmatpush.msra.mxu0 %v133
    %1161 = vmatpush.msra.mxu0 %v129
    %1162 = vmatpush.msra.mxu0 %v125
    %1163 = vmatpush.msra.mxu0 %v121
    %1164 = vmatpush.msra.mxu0 %v117
    %1165 = vmatpush.msra.mxu0 %v113
    %1166 = vmatpush.msra.mxu0 %v109
    %1167 = vmatpush.msra.mxu0 %v105
    %1168 = vmatpush.msra.mxu0 %v101
    %1169 = vmatmul.f32.gmra.mxu0 %v1085
    %v1170 = vpop.f32.mrf.mxu0
    %v1171 = vadd.f32 0.0, %v1170
    %1172 = vdwg.mxu0
    %v1173 = vadd.f32 %v1089, %v1111
    %v1174 = vadd.f32 %v1090, %v1131
    %v1175 = vadd.f32 %v1091, %v1151
    %v1176 = vadd.f32 %v1092, %v1171
    %v1177 = vxor.u32 %v1173, 2147483648
    %v1178 = vxor.u32 %v1174, 2147483648
    %v1179 = vxor.u32 %v1175, 2147483648
    %v1180 = vmul.f32 %v1177, 1.442695
    %v1181 = vpow.pop %v1180
    %v1182 = vmul.f32 %v1178, 1.442695
    %v1183 = vpow.pop %v1182
    %v1184 = vmul.f32 %v1179, 1.442695
    %v1185 = vpow.pop %v1184
    %v1186 = vadd.f32 %v1181, 1.0
    %v1187 = vadd.f32 %v1183, 1.0
    %v1188 = vadd.f32 %v1185, 1.0
    %v1189 = vrcp.pop %v1186
    %v1190 = vmul.f32 %v1186, %v1189
    %v1191 = vsub.f32 1.0, %v1190
    %v1192 = vmul.f32 %v1189, %v1191
    %v1193 = vadd.f32 %v1189, %v1192
    %vm1194 = vweird.f32 %v1186
    %vm1195 = vweird.f32 %v1189
    %vm1196 = vmor %vm1194, %vm1195
    %v1197 = vsel %vm1196, %v1189, %v1193
    %v1198 = vand.u32 2147483647, %v1186
    %vm1199 = vcmp.eq.f32.partialorder %v1198, 8.507059e+37
    %v1200 = vand.u32 %v1186, 2147483648
    %v1201 = vor.u32 1.1754944e-38, %v1200
    %v1202 = vsel %vm1199, %v1201, %v1197
    %v1203 = vmul.f32 1.0, %v1202
    %v1204 = vrcp.pop %v1187
    %v1205 = vmul.f32 %v1187, %v1204
    %v1206 = vsub.f32 1.0, %v1205
    %v1207 = vmul.f32 %v1204, %v1206
    %v1208 = vadd.f32 %v1204, %v1207
    %vm1209 = vweird.f32 %v1187
    %vm1210 = vweird.f32 %v1204
    %vm1211 = vmor %vm1209, %vm1210
    %v1212 = vsel %vm1211, %v1204, %v1208
    %v1213 = vand.u32 2147483647, %v1187
    %vm1214 = vcmp.eq.f32.partialorder %v1213, 8.507059e+37
    %v1215 = vand.u32 %v1187, 2147483648
    %v1216 = vor.u32 1.1754944e-38, %v1215
    %v1217 = vsel %vm1214, %v1216, %v1212
    %v1218 = vmul.f32 1.0, %v1217
    %v1219 = vrcp.pop %v1188
    %v1220 = vmul.f32 %v1188, %v1219
    %v1221 = vsub.f32 1.0, %v1220
    %v1222 = vmul.f32 %v1219, %v1221
    %v1223 = vadd.f32 %v1219, %v1222
    %vm1224 = vweird.f32 %v1188
    %vm1225 = vweird.f32 %v1219
    %vm1226 = vmor %vm1224, %vm1225
    %v1227 = vsel %vm1226, %v1219, %v1223
    %v1228 = vand.u32 2147483647, %v1188
    %vm1229 = vcmp.eq.f32.partialorder %v1228, 8.507059e+37
    %v1230 = vand.u32 %v1188, 2147483648
    %v1231 = vor.u32 1.1754944e-38, %v1230
    %v1232 = vsel %vm1229, %v1231, %v1227
    %v1233 = vmul.f32 1.0, %v1232
    %v1234 = vtanh.pop %v1176
    %v1235 = vmul.f32 %v1218, %v1083
    %v1236 = vmul.f32 %v1203, %v1234
    %v1237 = vadd.f32 %v1235, %v1236
    %v1238 = vtanh.pop %v1237
    %v1239 = vmul.f32 %v1233, %v1238
    %s1240 = scalar_lea.vmem [#allocation12], 8
    %1241 = vst [vmem:[%s1240] sm:$0xff] %v1239
    %v1242 = vld [vmem:[#allocation4] sm:$0xff]
    %v1243 = vld [vmem:[#allocation4 + $0x8] sm:$0xff]
    %v1244 = vld [vmem:[#allocation4 + $0x10] sm:$0xff]
    %v1245 = vld [vmem:[#allocation4 + $0x18] sm:$0xff]
    %1246 = vmatpush.msra.mxu0 %v158
    %1247 = vmatpush.msra.mxu0 %v154
    %1248 = vmatpush.msra.mxu0 %v150
    %1249 = vmatpush.msra.mxu0 %v146
    %1250 = vmatpush.msra.mxu0 %v142
    %1251 = vmatpush.msra.mxu0 %v138
    %1252 = vmatpush.msra.mxu0 %v134
    %1253 = vmatpush.msra.mxu0 %v130
    %1254 = vmatpush.msra.mxu0 %v126
    %1255 = vmatpush.msra.mxu0 %v122
    %1256 = vmatpush.msra.mxu0 %v118
    %1257 = vmatpush.msra.mxu0 %v114
    %1258 = vmatpush.msra.mxu0 %v110
    %1259 = vmatpush.msra.mxu0 %v106
    %1260 = vmatpush.msra.mxu0 %v102
    %1261 = vmatpush.msra.mxu0 %v98
    %1262 = vmatmul.f32.gmra.mxu0 %v1239
    %v1263 = vpop.f32.mrf.mxu0
    %v1264 = vadd.f32 0.0, %v1263
    %1265 = vdwg.mxu0
    %1266 = vmatpush.msra.mxu0 %v159
    %1267 = vmatpush.msra.mxu0 %v155
    %1268 = vmatpush.msra.mxu0 %v151
    %1269 = vmatpush.msra.mxu0 %v147
    %1270 = vmatpush.msra.mxu0 %v143
    %1271 = vmatpush.msra.mxu0 %v139
    %1272 = vmatpush.msra.mxu0 %v135
    %1273 = vmatpush.msra.mxu0 %v131
    %1274 = vmatpush.msra.mxu0 %v127
    %1275 = vmatpush.msra.mxu0 %v123
    %1276 = vmatpush.msra.mxu0 %v119
    %1277 = vmatpush.msra.mxu0 %v115
    %1278 = vmatpush.msra.mxu0 %v111
    %1279 = vmatpush.msra.mxu0 %v107
    %1280 = vmatpush.msra.mxu0 %v103
    %1281 = vmatpush.msra.mxu0 %v99
    %1282 = vmatmul.f32.gmra.mxu0 %v1239
    %v1283 = vpop.f32.mrf.mxu0
    %v1284 = vadd.f32 0.0, %v1283
    %1285 = vdwg.mxu0
    %1286 = vmatpush.msra.mxu0 %v160
    %1287 = vmatpush.msra.mxu0 %v156
    %1288 = vmatpush.msra.mxu0 %v152
    %1289 = vmatpush.msra.mxu0 %v148
    %1290 = vmatpush.msra.mxu0 %v144
    %1291 = vmatpush.msra.mxu0 %v140
    %1292 = vmatpush.msra.mxu0 %v136
    %1293 = vmatpush.msra.mxu0 %v132
    %1294 = vmatpush.msra.mxu0 %v128
    %1295 = vmatpush.msra.mxu0 %v124
    %1296 = vmatpush.msra.mxu0 %v120
    %1297 = vmatpush.msra.mxu0 %v116
    %1298 = vmatpush.msra.mxu0 %v112
    %1299 = vmatpush.msra.mxu0 %v108
    %1300 = vmatpush.msra.mxu0 %v104
    %1301 = vmatpush.msra.mxu0 %v100
    %1302 = vmatmul.f32.gmra.mxu0 %v1239
    %v1303 = vpop.f32.mrf.mxu0
    %v1304 = vadd.f32 0.0, %v1303
    %1305 = vdwg.mxu0
    %1306 = vmatpush.msra.mxu0 %v161
    %1307 = vmatpush.msra.mxu0 %v157
    %1308 = vmatpush.msra.mxu0 %v153
    %1309 = vmatpush.msra.mxu0 %v149
    %1310 = vmatpush.msra.mxu0 %v145
    %1311 = vmatpush.msra.mxu0 %v141
    %1312 = vmatpush.msra.mxu0 %v137
    %1313 = vmatpush.msra.mxu0 %v133
    %1314 = vmatpush.msra.mxu0 %v129
    %1315 = vmatpush.msra.mxu0 %v125
    %1316 = vmatpush.msra.mxu0 %v121
    %1317 = vmatpush.msra.mxu0 %v117
    %1318 = vmatpush.msra.mxu0 %v113
    %1319 = vmatpush.msra.mxu0 %v109
    %1320 = vmatpush.msra.mxu0 %v105
    %1321 = vmatpush.msra.mxu0 %v101
    %1322 = vmatmul.f32.gmra.mxu0 %v1239
    %v1323 = vpop.f32.mrf.mxu0
    %v1324 = vadd.f32 0.0, %v1323
    %1325 = vdwg.mxu0
    %v1326 = vadd.f32 %v1242, %v1264
    %v1327 = vadd.f32 %v1243, %v1284
    %v1328 = vadd.f32 %v1244, %v1304
    %v1329 = vadd.f32 %v1245, %v1324
    %v1330 = vxor.u32 %v1326, 2147483648
    %v1331 = vxor.u32 %v1327, 2147483648
    %v1332 = vxor.u32 %v1328, 2147483648
    %v1333 = vmul.f32 %v1330, 1.442695
    %v1334 = vpow.pop %v1333
    %v1335 = vmul.f32 %v1331, 1.442695
    %v1336 = vpow.pop %v1335
    %v1337 = vmul.f32 %v1332, 1.442695
    %v1338 = vpow.pop %v1337
    %v1339 = vadd.f32 %v1334, 1.0
    %v1340 = vadd.f32 %v1336, 1.0
    %v1341 = vadd.f32 %v1338, 1.0
    %v1342 = vrcp.pop %v1339
    %v1343 = vmul.f32 %v1339, %v1342
    %v1344 = vsub.f32 1.0, %v1343
    %v1345 = vmul.f32 %v1342, %v1344
    %v1346 = vadd.f32 %v1342, %v1345
    %vm1347 = vweird.f32 %v1339
    %vm1348 = vweird.f32 %v1342
    %vm1349 = vmor %vm1347, %vm1348
    %v1350 = vsel %vm1349, %v1342, %v1346
    %v1351 = vand.u32 2147483647, %v1339
    %vm1352 = vcmp.eq.f32.partialorder %v1351, 8.507059e+37
    %v1353 = vand.u32 %v1339, 2147483648
    %v1354 = vor.u32 1.1754944e-38, %v1353
    %v1355 = vsel %vm1352, %v1354, %v1350
    %v1356 = vmul.f32 1.0, %v1355
    %v1357 = vrcp.pop %v1340
    %v1358 = vmul.f32 %v1340, %v1357
    %v1359 = vsub.f32 1.0, %v1358
    %v1360 = vmul.f32 %v1357, %v1359
    %v1361 = vadd.f32 %v1357, %v1360
    %vm1362 = vweird.f32 %v1340
    %vm1363 = vweird.f32 %v1357
    %vm1364 = vmor %vm1362, %vm1363
    %v1365 = vsel %vm1364, %v1357, %v1361
    %v1366 = vand.u32 2147483647, %v1340
    %vm1367 = vcmp.eq.f32.partialorder %v1366, 8.507059e+37
    %v1368 = vand.u32 %v1340, 2147483648
    %v1369 = vor.u32 1.1754944e-38, %v1368
    %v1370 = vsel %vm1367, %v1369, %v1365
    %v1371 = vmul.f32 1.0, %v1370
    %v1372 = vrcp.pop %v1341
    %v1373 = vmul.f32 %v1341, %v1372
    %v1374 = vsub.f32 1.0, %v1373
    %v1375 = vmul.f32 %v1372, %v1374
    %v1376 = vadd.f32 %v1372, %v1375
    %vm1377 = vweird.f32 %v1341
    %vm1378 = vweird.f32 %v1372
    %vm1379 = vmor %vm1377, %vm1378
    %v1380 = vsel %vm1379, %v1372, %v1376
    %v1381 = vand.u32 2147483647, %v1341
    %vm1382 = vcmp.eq.f32.partialorder %v1381, 8.507059e+37
    %v1383 = vand.u32 %v1341, 2147483648
    %v1384 = vor.u32 1.1754944e-38, %v1383
    %v1385 = vsel %vm1382, %v1384, %v1380
    %v1386 = vmul.f32 1.0, %v1385
    %v1387 = vtanh.pop %v1329
    %v1388 = vmul.f32 %v1371, %v1237
    %v1389 = vmul.f32 %v1356, %v1387
    %v1390 = vadd.f32 %v1388, %v1389
    %v1391 = vtanh.pop %v1390
    %v1392 = vmul.f32 %v1386, %v1391
    %1393 = vst [vmem:[#allocation12] sm:$0xff] %v1392
    %1394 = vst [vmem:[#allocation2] sm:$0xff] %v1392
    %1395 = vst [vmem:[#allocation3] sm:$0xff] %v1390
    // Predicated region
    $region38: #{tpu_custom_call.1} parent=1 // pred_check
      %p1396 = pneg %p90
    $region39: #{tpu_custom_call.1} parent=1 // pred_check_branch
      %1398 = sbr.rel (%p1396) target = $region41
    $region40: #{tpu_custom_call.1} parent=1 // pred_region
      %1399 = vst [vmem:[#allocation13] sm:$0xff] %v1392
      %1400 = vst [vmem:[#allocation15] sm:$0xff] %v1390
    $region41: #{tpu_custom_call.1} parent=1 // pred_fallthru
      _
    // Predicated region
    $region42: #{tpu_custom_call.1} parent=1 // pred_check
      _
    $region43: #{tpu_custom_call.1} parent=1 // pred_check_branch
      %1402 = sbr.rel (0) target = $region45
    $region44: #{tpu_custom_call.1} parent=1 // pred_region
      %s1403 = ssub.s32 0, 0
      %s1404 = smul.u32 8, %s1403
      %1406 = vsyncadd [#allocation6], 0
      %s1407 = smul.addr %s1404, 8
      %s1408 = scalar_lea.hbm %s4, %s1407
      %s1409 = sshll.u32 [#allocation12], 4
      %s1410 = int_to_ptr.vmem [resolvable:$true] %s1409
      %s1411 = sshll.u32 %s1408, 4
      %s1412 = int_to_ptr.hbm [resolvable:$true] %s1411
      %1417 = dma.vmem_to_hbm [thread:$0]  %s1410, 1024, %s1412, [#allocation6], 128, 128, 8
    $region45: #{tpu_custom_call.1} parent=1 // pred_fallthru
      _
    // Predicated region
    $region46: #{tpu_custom_call.1} parent=1 // pred_check
      _
    $region47: #{tpu_custom_call.1} parent=1 // pred_check_branch
      %1419 = sbr.rel (0) target = $region49
    $region48: #{tpu_custom_call.1} parent=1 // pred_region
      %1421 = vsyncadd [#allocation14], 0
      %s1423 = sshll.u32 [#allocation13], 4
      %s1424 = int_to_ptr.vmem [resolvable:$true] %s1423
      %s1425 = sshll.u32 %s5, 4
      %s1426 = int_to_ptr.hbm [resolvable:$true] %s1425
      %1428 = dma.vmem_to_hbm [thread:$0]  %s1424, 128, %s1426, [#allocation14]
    $region49: #{tpu_custom_call.1} parent=1 // pred_fallthru
      _
    // Predicated region
    $region50: #{tpu_custom_call.1} parent=1 // pred_check
      _
    $region51: #{tpu_custom_call.1} parent=1 // pred_check_branch
      %1430 = sbr.rel (0) target = $region53
    $region52: #{tpu_custom_call.1} parent=1 // pred_region
      %1432 = vsyncadd [#allocation14], 0
      %s1434 = sshll.u32 [#allocation15], 4
      %s1435 = int_to_ptr.vmem [resolvable:$true] %s1434
      %s1436 = sshll.u32 %s6, 4
      %s1437 = int_to_ptr.hbm [resolvable:$true] %s1436
      %1439 = dma.vmem_to_hbm [thread:$0]  %s1435, 128, %s1437, [#allocation14]
    $region53: #{tpu_custom_call.1} parent=1 // pred_fallthru
      _
    // Predicated region
    $region54: #{tpu_custom_call.1} parent=1 // pred_check
      _
    $region55: #{tpu_custom_call.1} parent=1 // pred_check_branch
      %1441 = sbr.rel (0) target = $region57
    $region56: #{tpu_custom_call.1} parent=1 // pred_region
      %1443 = dma.done [#allocation6], 1024
    $region57: #{tpu_custom_call.1} parent=1 // pred_fallthru
      _
    // Predicated region
    $region58: #{tpu_custom_call.1} parent=1 // pred_check
      _
    $region59: #{tpu_custom_call.1} parent=1 // pred_check_branch
      %1445 = sbr.rel (0) target = $region61
    $region60: #{tpu_custom_call.1} parent=1 // pred_region
      %1447 = dma.done [#allocation14], 128
    $region61: #{tpu_custom_call.1} parent=1 // pred_fallthru
      _
    // Predicated region
    $region62: #{tpu_custom_call.1} parent=1 // pred_check
      _
    $region63: #{tpu_custom_call.1} parent=1 // pred_check_branch
      %1449 = sbr.rel (0) target = $region65
    $region64: #{tpu_custom_call.1} parent=1 // pred_region
      %1451 = dma.done [#allocation14], 128
    $region65: #{tpu_custom_call.1} parent=1 // pred_fallthru
      _
    %1452 = vsyncpa [#allocation5], 1
    %1453 = vsyncpa [#allocation8], 1
    %1454 = vsyncpa [#allocation11], 1
    %1455 = vsyncpa [#allocation6], 1
    %1456 = vsyncpa [#allocation14], 1

</llo_original>
